<compile_context>
chip_gen: v5e
topology: v5e:2x2
jax: 0.10.0
libtpu: 0.0.40
codegen_flags: <defaults>
</compile_context>

<pallas_src>
import functools
import math

import jax
import jax.numpy as jnp
from jax.experimental import pallas as pl
from jax.experimental.pallas import tpu as pltpu


def _gcn_kernel(*refs, residual: bool, x_resident: bool, tk: int):
    """refs = (g_ref, xw_ref, h0w_ref[, xres_ref], o_ref)."""
    g_ref, xw_ref, h0w_ref = refs[0], refs[1], refs[2]
    if residual:
        xres_ref, o_ref = refs[3], refs[4]
    else:
        xres_ref, o_ref = None, refs[3]

    k = pl.program_id(1)

    # int8 / fp8 dequant is a pure VPU cast (the scale was folded into xw by the
    # wrapper); a bf16 -> bf16 astype is a no-op.
    g = g_ref[...].astype(jnp.bfloat16)

    if x_resident:
        # xw lives whole in VMEM (constant block index -> fetched once); slice the
        # k-tile in-kernel instead of re-DMAing it once per row tile.
        k0 = pl.multiple_of(k * tk, tk)
        xw = xw_ref[pl.ds(k0, tk), :]
    else:
        xw = xw_ref[...]

    part = jnp.dot(g, xw, preferred_element_type=jnp.float32)

    @pl.when(k == 0)
    def _():
        o_ref[...] = jnp.zeros_like(o_ref)

    # Output block index is constant over k -> o_ref is resident; accumulate in place.
    o_ref[...] += part

    @pl.when(k == pl.num_programs(1) - 1)
    def _():
        out = o_ref[...] + h0w_ref[...]
        if xres_ref is not None:
            out = out + xres_ref[...]
        o_ref[...] = out


def graph_convolution(x, adj, h0, lamda, alpha, l, G, weight,
                      residual=False, variant=False,
                      tm=512, tk=2048, g_dtype=jnp.bfloat16, x_resident=None):
    """Pallas implementation of GraphConvolution.forward (variant=False path).

    g_dtype: jnp.bfloat16 (default), jnp.int8 (v5e/v6e HBM-bound win) or
             jnp.float8_e4m3fn (v7x; the MXU there has no integer path).
    """
    del adj  # the reference module only stores adj; it is not used in compute
    if variant:
        raise NotImplementedError("variant=True path not implemented")

    N, F_in = x.shape
    F_out = weight.shape[1]
    # Non-variant GCNII blends (support @ W) with support itself -> F_in == F_out.
    assert F_in == F_out, "non-variant GraphConvolution requires in_features == out_features"

    # ---- tiling -------------------------------------------------------------
    tm = min(tm, N)
    tk = min(tk, N)
    # v7x megacore: keep the "parallel" i-axis extent >= 2 (ideally >= 8) so both
    # TensorCores get work; never shrink below 128 rows.
    while (N // tm) < 8 and tm > 512 and tm % 2 == 0:
        tm //= 2
    while (N // tm) < 2 and tm > 128 and tm % 2 == 0:
        tm //= 2
    assert N % tm == 0 and N % tk == 0, "N must be divisible by tm and tk"
    assert tm == N or tm % 8 == 0, "tm must be a multiple of 8 (or equal N)"
    assert tk == N or tk % 128 == 0, "tk must be a multiple of 128 (or equal N)"

    # ---- wrapper-side algebra (O(N*F^2), negligible vs the O(N^2*F) kernel) --
    theta = math.log(lamda / l + 1)
    hp = jax.lax.Precision.HIGHEST
    x32 = x.astype(jnp.float32)
    h0_32 = h0.astype(jnp.float32)
    w2 = (theta * weight.astype(jnp.float32)
          + (1.0 - theta) * jnp.eye(F_in, dtype=jnp.float32))

    # Quantize G (the only large streamed operand); fold its dequant scale into xw.
    G32 = G.astype(jnp.float32)
    if g_dtype == jnp.bfloat16:
        g_q = G32.astype(jnp.bfloat16)
        g_scale = jnp.float32(1.0)
    elif g_dtype == jnp.int8:
        amax = jnp.maximum(jnp.max(jnp.abs(G32)), 1e-30)
        g_scale = amax / 127.0
        g_q = jnp.clip(jnp.round(G32 / g_scale), -127.0, 127.0).astype(jnp.int8)
    else:  # fp8 (e4m3) for v7x
        amax = jnp.maximum(jnp.max(jnp.abs(G32)), 1e-30)
        g_scale = amax / 448.0
        g_q = (G32 / g_scale).astype(g_dtype)

    xw = ((1.0 - alpha) * jnp.dot(x32, w2, precision=hp) * g_scale).astype(jnp.bfloat16)
    h0w = (alpha * jnp.dot(h0_32, w2, precision=hp)).astype(jnp.float32)

    # ---- VMEM budget --------------------------------------------------------
    g_itemsize = jnp.dtype(g_dtype).itemsize
    xw_bytes = N * F_in * 2
    if x_resident is None:
        x_resident = xw_bytes <= (8 << 20)   # keep resident-x well inside v7x's 64 MiB

    footprint = 2 * tm * tk * g_itemsize                       # double-buffered G tiles
    footprint += 2 * xw_bytes if x_resident else 2 * tk * F_in * 2
    footprint += 2 * tm * F_in * 4                             # h0w row tiles
    footprint += 2 * tm * F_out * 4                            # output row tiles
    if residual:
        footprint += 2 * tm * F_in * 4
    assert footprint <= (44 << 20), "tile config exceeds the v7x-safe VMEM budget; reduce tm/tk"
    vmem_limit = min(max(footprint + (4 << 20), 16 << 20), 48 << 20)

    # ---- pallas_call --------------------------------------------------------
    if x_resident:
        xw_spec = pl.BlockSpec((N, F_in), lambda i, k: (0, 0))       # fetched once, resident
    else:
        xw_spec = pl.BlockSpec((tk, F_in), lambda i, k: (k, 0))      # streamed per k

    in_specs = [
        pl.BlockSpec((tm, tk), lambda i, k: (i, k)),                 # G tile (dominant stream)
        xw_spec,
        pl.BlockSpec((tm, F_in), lambda i, k: (i, 0)),               # h0w row tile (f32)
    ]
    args = [g_q, xw, h0w]
    if residual:
        in_specs.append(pl.BlockSpec((tm, F_in), lambda i, k: (i, 0)))
        args.append(x32)

    kernel = functools.partial(_gcn_kernel, residual=residual,
                               x_resident=x_resident, tk=tk)

    out = pl.pallas_call(
        kernel,
        out_shape=jax.ShapeDtypeStruct((N, F_out), jnp.float32),
        grid_spec=pltpu.PrefetchScalarGridSpec(
            num_scalar_prefetch=0,
            grid=(N // tm, N // tk),                 # reduction (k) axis last
            in_specs=in_specs,
            out_specs=pl.BlockSpec((tm, F_out), lambda i, k: (i, 0)),
        ),
        compiler_params=pltpu.CompilerParams(
            dimension_semantics=("parallel", "arbitrary"),
            vmem_limit_bytes=vmem_limit,
        ),
    )(*args)

    return out


def _reference(x, h0, lamda, alpha, l, G, weight, residual):
    """Pure-f32 reference following the PyTorch forward exactly."""
    hp = jax.lax.Precision.HIGHEST
    theta = math.log(lamda / l + 1)
    hi = jnp.dot(G, x, precision=hp)
    support = (1.0 - alpha) * hi + alpha * h0
    out = theta * jnp.dot(support, weight, precision=hp) + (1.0 - theta) * support
    if residual:
        out = out + x
    return out


if __name__ == "__main__":
    # Small synthetic problem: 512 nodes, hidden = in = out = 32.
    N, F = 512, 32
    key = jax.random.PRNGKey(0)
    k_x, k_h0, k_g, k_w = jax.random.split(key, 4)

    x = jax.random.normal(k_x, (N, F), dtype=jnp.float32)
    h0 = jax.random.normal(k_h0, (N, F), dtype=jnp.float32)

    # Synthetic row-normalized propagation matrix (dense stand-in for a sparse graph).
    g_raw = jax.random.uniform(k_g, (N, N), dtype=jnp.float32)
    G = g_raw / jnp.sum(g_raw, axis=1, keepdims=True)
    adj = G  # stored-only argument in the reference module

    # Parameter init matching reset_parameters(): weight ~ U(-stdv, stdv).
    stdv = 1.0 / math.sqrt(F)
    weight = jax.random.uniform(k_w, (F, F), dtype=jnp.float32,
                                minval=-stdv, maxval=stdv)

    lamda, alpha, l = 0.5, 0.1, 1

    cases = [
        # (residual, kwargs, atol, rtol)
        (False, dict(), 5e-3, 2e-2),                                   # default tiles, resident xw
        (True, dict(tm=128, tk=128, x_resident=False), 5e-3, 2e-2),    # multi-k grid, streamed xw
        (False, dict(tm=128, tk=256, g_dtype=jnp.int8), 1e-2, 5e-2),   # int8-G path (v5e/v6e lever)
    ]

    for residual, kwargs, atol, rtol in cases:
        out = graph_convolution(x, adj, h0, lamda, alpha, l, G, weight,
                                residual=residual, variant=False, **kwargs)
        out = jax.block_until_ready(out)

        ref = _reference(x, h0, lamda, alpha, l, G, weight, residual)
        assert out.shape == (N, F)
        assert jnp.allclose(out, ref, atol=atol, rtol=rtol), \
            f"mismatch vs reference (residual={residual}, kwargs={kwargs})"

    print("KERNEL_OK")
</pallas_src>

<mosaic_0001>
module attributes {stable_mosaic.version = 11 : i64} {
  func.func @_gcn_kernel(%arg0: i32, %arg1: i32, %arg2: memref<256x512xbf16, #tpu.memory_space<vmem>>, %arg3: memref<512x32xbf16, #tpu.memory_space<vmem>>, %arg4: memref<256x32xf32, #tpu.memory_space<vmem>>, %arg5: memref<256x32xf32, #tpu.memory_space<vmem>>) attributes {dimension_semantics = [#tpu.dimension_semantics<parallel>, #tpu.dimension_semantics<arbitrary>], iteration_bounds = array<i64: 2, 1>, scalar_prefetch = 0 : i64, scratch_operands = 0 : i64, tpu.core_type = #tpu.core_type<tc>, window_params = [{transform_indices = @transform_0, window_bounds = array<i64: 256, 512>}, {pipeline_mode = #tpu.pipeline_mode<synchronous>, transform_indices = @transform_1, window_bounds = array<i64: 512, 32>}, {transform_indices = @transform_2, window_bounds = array<i64: 256, 32>}, {transform_indices = @transform_3, window_bounds = array<i64: 256, 32>}]} {
    %c0 = arith.constant 0 : index
    %c0_0 = arith.constant 0 : index
    %0 = vector.load %arg2[%c0, %c0_0] : memref<256x512xbf16, #tpu.memory_space<vmem>>, vector<256x512xbf16>
    %c512_i32 = arith.constant 512 : i32
    %1 = arith.muli %arg1, %c512_i32 : i32
    %2 = tpu.assume_multiple %1, 512 : i32
    %3 = arith.index_cast %2 : i32 to index
    %c0_1 = arith.constant 0 : index
    %4 = vector.load %arg3[%3, %c0_1] : memref<512x32xbf16, #tpu.memory_space<vmem>>, vector<512x32xbf16>
    %cst = arith.constant dense<0.000000e+00> : vector<256x32xf32>
    %5 = tpu.matmul %0, %4, %cst {dimension_numbers = #tpu.dot_dimension_numbers<[1], [0], [0], [1], [0, 0, 1, 1], [], []>} : vector<256x512xbf16>, vector<512x32xbf16>, vector<256x32xf32> -> vector<256x32xf32>
    %c0_i32 = arith.constant 0 : i32
    %6 = arith.cmpi eq, %arg1, %c0_i32 : i32
    %7 = arith.extui %6 : i1 to i32
    %c0_i32_2 = arith.constant 0 : i32
    %8 = arith.cmpi ne, %7, %c0_i32_2 : i32
    scf.if %8 {
      %cst_9 = arith.constant 0.000000e+00 : f32
      %15 = vector.broadcast %cst_9 : f32 to vector<256x32xf32>
      %c0_10 = arith.constant 0 : index
      %c0_11 = arith.constant 0 : index
      %16 = vector.load %arg5[%c0_10, %c0_11] : memref<256x32xf32, #tpu.memory_space<vmem>>, vector<256x32xf32>
      tpu.vector_store %arg5[%c0_10, %c0_11], %15 {strides = array<i32>} : memref<256x32xf32, #tpu.memory_space<vmem>>, vector<256x32xf32>,
    } else {
    }
    %c0_3 = arith.constant 0 : index
    %c0_4 = arith.constant 0 : index
    %9 = vector.load %arg5[%c0_3, %c0_4] : memref<256x32xf32, #tpu.memory_space<vmem>>, vector<256x32xf32>
    %10 = arith.addf %9, %5 : vector<256x32xf32>
    %c0_5 = arith.constant 0 : index
    %c0_6 = arith.constant 0 : index
    %11 = vector.load %arg5[%c0_5, %c0_6] : memref<256x32xf32, #tpu.memory_space<vmem>>, vector<256x32xf32>
    tpu.vector_store %arg5[%c0_5, %c0_6], %10 {strides = array<i32>} : memref<256x32xf32, #tpu.memory_space<vmem>>, vector<256x32xf32>,
    %c0_i32_7 = arith.constant 0 : i32
    %12 = arith.cmpi eq, %arg1, %c0_i32_7 : i32
    %13 = arith.extui %12 : i1 to i32
    %c0_i32_8 = arith.constant 0 : i32
    %14 = arith.cmpi ne, %13, %c0_i32_8 : i32
    scf.if %14 {
      %c0_9 = arith.constant 0 : index
      %c0_10 = arith.constant 0 : index
      %15 = vector.load %arg5[%c0_9, %c0_10] : memref<256x32xf32, #tpu.memory_space<vmem>>, vector<256x32xf32>
      %c0_11 = arith.constant 0 : index
      %c0_12 = arith.constant 0 : index
      %16 = vector.load %arg4[%c0_11, %c0_12] : memref<256x32xf32, #tpu.memory_space<vmem>>, vector<256x32xf32>
      %17 = arith.addf %15, %16 : vector<256x32xf32>
      %c0_13 = arith.constant 0 : index
      %c0_14 = arith.constant 0 : index
      %18 = vector.load %arg5[%c0_13, %c0_14] : memref<256x32xf32, #tpu.memory_space<vmem>>, vector<256x32xf32>
      tpu.vector_store %arg5[%c0_13, %c0_14], %17 {strides = array<i32>} : memref<256x32xf32, #tpu.memory_space<vmem>>, vector<256x32xf32>,
    } else {
    }
    return
  }
  func.func @transform_0(%arg0: i32, %arg1: i32) -> (i32, i32) {
    %c0_i32 = arith.constant 0 : i32
    return %arg0, %arg1 : i32, i32
  }
  func.func @transform_1(%arg0: i32, %arg1: i32) -> (i32, i32) {
    %c0_i32 = arith.constant 0 : i32
    %c0_i32_0 = arith.constant 0 : i32
    %c0_i32_1 = arith.constant 0 : i32
    return %c0_i32, %c0_i32_0 : i32, i32
  }
  func.func @transform_2(%arg0: i32, %arg1: i32) -> (i32, i32) {
    %c0_i32 = arith.constant 0 : i32
    %c0_i32_0 = arith.constant 0 : i32
    return %arg0, %c0_i32 : i32, i32
  }
  func.func @transform_3(%arg0: i32, %arg1: i32) -> (i32, i32) {
    %c0_i32 = arith.constant 0 : i32
    %c0_i32_0 = arith.constant 0 : i32
    return %arg0, %c0_i32 : i32, i32
  }
}

</mosaic_0001>

<llo_original>
// kernel: tpu_custom_call.1
$region0: #{tpu_custom_call.1}
  #allocation0 [shape = 'u32[]', space=smem, size = 0x4, offset = 0x4, fixed_abs, tag = 'smem constant byte address 0x4 - core index']
  #allocation1 [shape = 'u32[72,128]{1,0:T(1,128)}', space=vmem, size = 0x9000, scoped, tag = 'internal scratch']
  %s0 = inlined_call_operand.hbm [shape: bf16[512,512], index: 0, kind: input, shape index: {}]
  %s1 = inlined_call_operand.vmem [shape: bf16[512,32], index: 1, kind: input, shape index: {}]
  %s2 = inlined_call_operand.vmem [shape: f32[512,32], index: 2, kind: input, shape index: {}]
  %s3 = inlined_call_operand.vmem [shape: f32[512,32], index: 3, kind: output, shape index: {}]
  %s4 = sld [smem:[#allocation0]]
  $region57: #{tpu_custom_call.1} parent=0
    _
  %s6 = ssub.s32 1, %s4
  %s7 = scalar_select 0, %s6, %s4
  $region1: #{tpu_custom_call.1} parent=0
    #allocation2 [shape = 'u8[524288]{0}', space=vmem, size = 0x80000, scoped, tag = 'input window, operand 0']
    #allocation3 [shape = 's32[2]{0}', space=sflag, size = 0x8, scoped, tag = 'scoped memory for tpu_custom_call.1']
    %8 = vsyncpa [#allocation3], 0
    %s9 = scalar_lea.sflag [#allocation3], 1
    %10 = vsyncpa %s9, 0
    loop: start=0, step=1, limit=4
    $region2: #{tpu_custom_call.1} parent=1 // loop_pre_header
      _
    $region3: #{tpu_custom_call.1} parent=1 // loop_header
      %s12 = sphi 0, %s16
      %p13 = scmp.ge.s32.totalorder %s12, 4
      %s19 = sphi 0, %s31
      %s20 = sphi 0, %s27
      %s21 = sphi 0, %s19
      %s22 = sphi 0, %s20
      %s23 = sphi 0, %s21
      %s24 = sphi 0, %s22
      %s36 = sphi 0, %s38
      %s39 = sphi 0, %s36
      %s40 = sphi 0, %s39
      %s56 = sphi 0, %s40
      %s60 = sphi 0, %s60
      %s62 = sphi 0, %s60
      %s63 = sphi 0, %s62
      %s77 = sphi 0, %s63
      %s83 = sphi 0, %s85
      %s86 = sphi 0, %s83
      %s87 = sphi 0, %s86
      %s103 = sphi 0, %s87
      %s109 = sphi 0, %s111
      %s112 = sphi 0, %s109
      %s113 = sphi 0, %s112
      %s129 = sphi 0, %s113
    $region4: #{tpu_custom_call.1} parent=1 // loop_header_branch
      %15 = sbr.rel (%p13) target = $region8
    $region5: #{tpu_custom_call.1} parent=1 // loop_body
      %s17 = ssub.s32 %s12, 1
      %s18 = ssub.s32 %s12, 2
      %s25 = sadd.s32 1, %s20
      %p26 = scmp.ge.s32.totalorder %s25, 1
      %s27 = scalar_select %p26, 0, %s25
      %s28 = sadd.s32 1, %s19
      %s29 = scalar_select %p26, %s28, %s19
      %p30 = scmp.ge.s32.totalorder %s29, 2
      %s31 = scalar_select %p30, 0, %s29
      %s32 = ssub.s32 %s19, %s31
      %s33 = ssub.s32 %s20, %s27
      %s34 = sor.u32 %s32, %s33
      %p35 = scmp.eq.s32.totalorder %s34, 0
      %s37 = sadd.s32 %s36, 1
      %s38 = scalar_select %p35, %s36, %s37
      %p41 = pneg %p35
      %p42 = scmp.eq.s32.totalorder %s12, 1
      %p43 = por %p41, %p42
      %p44 = scmp.ne.s32.totalorder %s36, %s39
      %p45 = scmp.eq.s32.totalorder %s12, 0
      %p46 = por %p44, %p45
      %p47 = scmp.ne.s32.totalorder %s36, %s39
      %p48 = scmp.eq.s32.totalorder %s17, 1
      %p49 = por %p47, %p48
      %p50 = scmp.ne.s32.totalorder %s39, %s40
      %p51 = scmp.eq.s32.totalorder %s17, 0
      %p52 = por %p50, %p51
      %p53 = scmp.ne.s32.totalorder %s39, %s40
      %p54 = scmp.eq.s32.totalorder %s18, 1
      %p55 = por %p53, %p54
      %p57 = scmp.ne.s32.totalorder %s40, %s56
      %p58 = scmp.eq.s32.totalorder %s18, 0
      %p59 = por %p57, %p58
      %s61 = sadd.s32 %s60, 1
      %p64 = scmp.eq.s32.totalorder %s12, 1
      %p65 = scmp.ne.s32.totalorder %s60, %s62
      %p66 = scmp.eq.s32.totalorder %s12, 0
      %p67 = por %p65, %p66
      %p68 = scmp.ne.s32.totalorder %s60, %s62
      %p69 = scmp.eq.s32.totalorder %s17, 1
      %p70 = por %p68, %p69
      %p71 = scmp.ne.s32.totalorder %s62, %s63
      %p72 = scmp.eq.s32.totalorder %s17, 0
      %p73 = por %p71, %p72
      %p74 = scmp.ne.s32.totalorder %s62, %s63
      %p75 = scmp.eq.s32.totalorder %s18, 1
      %p76 = por %p74, %p75
      %p78 = scmp.ne.s32.totalorder %s63, %s77
      %p79 = scmp.eq.s32.totalorder %s18, 0
      %p80 = por %p78, %p79
      %s81 = ssub.s32 %s19, %s31
      %p82 = scmp.eq.s32.totalorder %s81, 0
      %s84 = sadd.s32 %s83, 1
      %s85 = scalar_select %p82, %s83, %s84
      %p88 = pneg %p82
      %p89 = scmp.eq.s32.totalorder %s12, 1
      %p90 = por %p88, %p89
      %p91 = scmp.ne.s32.totalorder %s83, %s86
      %p92 = scmp.eq.s32.totalorder %s12, 0
      %p93 = por %p91, %p92
      %p94 = scmp.ne.s32.totalorder %s83, %s86
      %p95 = scmp.eq.s32.totalorder %s17, 1
      %p96 = por %p94, %p95
      %p97 = scmp.ne.s32.totalorder %s86, %s87
      %p98 = scmp.eq.s32.totalorder %s17, 0
      %p99 = por %p97, %p98
      %p100 = scmp.ne.s32.totalorder %s86, %s87
      %p101 = scmp.eq.s32.totalorder %s18, 1
      %p102 = por %p100, %p101
      %p104 = scmp.ne.s32.totalorder %s87, %s103
      %p105 = scmp.eq.s32.totalorder %s18, 0
      %p106 = por %p104, %p105
      %s107 = ssub.s32 %s19, %s31
      %p108 = scmp.eq.s32.totalorder %s107, 0
      %s110 = sadd.s32 %s109, 1
      %s111 = scalar_select %p108, %s109, %s110
      %p114 = pneg %p108
      %p115 = scmp.eq.s32.totalorder %s12, 1
      %p116 = por %p114, %p115
      %p117 = scmp.ne.s32.totalorder %s109, %s112
      %p118 = scmp.eq.s32.totalorder %s12, 0
      %p119 = por %p117, %p118
      %p120 = scmp.ne.s32.totalorder %s109, %s112
      %p121 = scmp.eq.s32.totalorder %s17, 1
      %p122 = por %p120, %p121
      %p123 = scmp.ne.s32.totalorder %s112, %s113
      %p124 = scmp.eq.s32.totalorder %s17, 0
      %p125 = por %p123, %p124
      %p126 = scmp.ne.s32.totalorder %s112, %s113
      %p127 = scmp.eq.s32.totalorder %s18, 1
      %p128 = por %p126, %p127
      %p130 = scmp.ne.s32.totalorder %s113, %s129
      %p131 = scmp.eq.s32.totalorder %s18, 0
      %p132 = por %p130, %p131
      %p133 = scmp.le.s32.totalorder 1, %s12
      %p134 = scmp.lt.s32.totalorder %s12, 3
      %p135 = pnand %p133, %p134
      %p136 = pneg %p135
      // Predicated region
      $region9: #{tpu_custom_call.1} parent=5 // pred_check
        _
      $region10: #{tpu_custom_call.1} parent=5 // pred_check_branch
        %138 = sbr.rel (%p135) target = $region12
      $region11: #{tpu_custom_call.1} parent=5 // pred_region
        %s139 = ssub.s32 %s12, 1
        // Predicated region
        $region13: #{tpu_custom_call.1} parent=11 // pred_check
          %p140 = pneg %p73
        $region14: #{tpu_custom_call.1} parent=11 // pred_check_branch
          %142 = sbr.rel (%p140) target = $region16
        $region15: #{tpu_custom_call.1} parent=11 // pred_region
          _
        $region16: #{tpu_custom_call.1} parent=11 // pred_fallthru
          _
      $region12: #{tpu_custom_call.1} parent=5 // pred_fallthru
        _
      %p143 = scmp.lt.s32.totalorder %s12, 2
      // Predicated region
      $region17: #{tpu_custom_call.1} parent=5 // pred_check
        %p144 = pneg %p143
      $region18: #{tpu_custom_call.1} parent=5 // pred_check_branch
        %146 = sbr.rel (%p144) target = $region20
      $region19: #{tpu_custom_call.1} parent=5 // pred_region
        // Predicated region
        $region21: #{tpu_custom_call.1} parent=19 // pred_check
          %p147 = pneg %p46
        $region22: #{tpu_custom_call.1} parent=19 // pred_check_branch
          %149 = sbr.rel (%p147) target = $region24
        $region23: #{tpu_custom_call.1} parent=19 // pred_region
          %s150 = sand.u32 %s36, 1
          %s151 = scalar_lea.sflag [#allocation3], %s150
          %s152 = sand.u32 %s36, 1
          %s153 = smul.addr %s152, 512
          %s154 = scalar_lea.vmem [#allocation2], %s153
          %s155 = smul.u32 32, %s19
          %s156 = smul.u32 4, %s20
          %158 = vsyncadd %s151, 0
          %s159 = smul.addr %s155, 4
          %s160 = sadd.s32 %s156, %s159
          %s161 = smul.addr %s160, 4
          %s162 = scalar_lea.hbm %s0, %s161
          %s163 = sshll.u32 %s162, 4
          %s164 = int_to_ptr.hbm [resolvable:$true] %s163
          %s165 = sshll.u32 %s154, 4
          %s166 = int_to_ptr.vmem [resolvable:$true] %s165
          %171 = dma.hbm_to_vmem [thread:$0]  %s164, 8192, %s166, %s151, 256, 256, 16
        $region24: #{tpu_custom_call.1} parent=19 // pred_fallthru
          _
        // Predicated region
        $region25: #{tpu_custom_call.1} parent=19 // pred_check
          %p172 = pneg %p93
        $region26: #{tpu_custom_call.1} parent=19 // pred_check_branch
          %174 = sbr.rel (%p172) target = $region28
        $region27: #{tpu_custom_call.1} parent=19 // pred_region
          %s175 = smul.u32 32, %s19
          %p176 = scmp.lt.s32.totalorder %s175, 63
          %s177 = scalar_select %p176, %s175, 63
          %s178 = smul.addr %s177, 8
          %s179 = scalar_lea.vmem %s2, %s178
          %s180 = smul.u32 32, %s19
        $region28: #{tpu_custom_call.1} parent=19 // pred_fallthru
          _
      $region20: #{tpu_custom_call.1} parent=5 // pred_fallthru
        _
      %p181 = scmp.le.s32.totalorder 1, %s12
      %p182 = scmp.lt.s32.totalorder %s12, 3
      %p183 = pnand %p181, %p182
      %p184 = pneg %p183
      // Predicated region
      $region29: #{tpu_custom_call.1} parent=5 // pred_check
        _
      $region30: #{tpu_custom_call.1} parent=5 // pred_check_branch
        %186 = sbr.rel (%p183) target = $region32
      $region31: #{tpu_custom_call.1} parent=5 // pred_region
        %s187 = ssub.s32 %s12, 1
        %s188 = sand.u32 %s39, 1
        %s189 = scalar_lea.sflag [#allocation3], %s188
        %s190 = sand.u32 %s39, 1
        %s191 = smul.addr %s190, 512
        %s192 = scalar_lea.vmem [#allocation2], %s191
        // Predicated region
        $region33: #{tpu_custom_call.1} parent=31 // pred_check
          %p193 = pneg %p52
        $region34: #{tpu_custom_call.1} parent=31 // pred_check_branch
          %195 = sbr.rel (%p193) target = $region36
        $region35: #{tpu_custom_call.1} parent=31 // pred_region
          %197 = dma.done %s189, 8192
        $region36: #{tpu_custom_call.1} parent=31 // pred_fallthru
          _
        %s198 = sand.u32 %s39, 1
        %s199 = scalar_lea.sflag [#allocation3], %s198
        %s200 = sand.u32 %s39, 1
        %s201 = smul.addr %s200, 512
        %s202 = scalar_lea.vmem [#allocation2], %s201
        %p203 = pneg %p52
        %p204 = pneg %p49
        %p205 = pneg %p73
        %p206 = pneg %p70
        %s207 = smul.u32 32, %s21
        %p208 = scmp.lt.s32.totalorder %s207, 63
        %s209 = scalar_select %p208, %s207, 63
        %s210 = smul.addr %s209, 8
        %s211 = scalar_lea.vmem %s2, %s210
        %p212 = pneg %p99
        %p213 = pneg %p96
        %p214 = pneg %p125
        %p215 = pneg %p122
        %s216 = smul.u32 32, %s21
        %p217 = scmp.lt.s32.totalorder %s216, 63
        %s218 = scalar_select %p217, %s216, 63
        %s219 = smul.addr %s218, 8
        %s220 = scalar_lea.vmem %s3, %s219
        %s221 = smul.u32 32, %s21
        %s222 = smul.u32 4, %s22
        %s223 = smul.u32 32, %s21
        %p224 = scmp.lt.s32.totalorder %s223, 63
        %s225 = scalar_select %p224, %s223, 63
        %s226 = smul.addr %s225, 8
        %s227 = scalar_lea.vmem %s2, %s226
        %s228 = smul.u32 32, %s21
        %s229 = smul.u32 32, %s21
        %p230 = scmp.lt.s32.totalorder %s229, 63
        %s231 = scalar_select %p230, %s229, 63
        %s232 = smul.addr %s231, 8
        %s233 = scalar_lea.vmem %s3, %s232
        %s234 = smul.u32 32, %s21
        %v235 = vld [vmem:[%s192] sm:$0xff]
        %v236 = vld [vmem:[%s192 + $0x8] sm:$0xff]
        %v237 = vld [vmem:[%s192 + $0x10] sm:$0xff]
        %v238 = vld [vmem:[%s192 + $0x18] sm:$0xff]
        %v239 = vld [vmem:[%s192 + $0x20] sm:$0xff]
        %v240 = vld [vmem:[%s192 + $0x28] sm:$0xff]
        %v241 = vld [vmem:[%s192 + $0x30] sm:$0xff]
        %v242 = vld [vmem:[%s192 + $0x38] sm:$0xff]
        %v243 = vld [vmem:[%s192 + $0x40] sm:$0xff]
        %v244 = vld [vmem:[%s192 + $0x48] sm:$0xff]
        %v245 = vld [vmem:[%s192 + $0x50] sm:$0xff]
        %v246 = vld [vmem:[%s192 + $0x58] sm:$0xff]
        %v247 = vld [vmem:[%s192 + $0x60] sm:$0xff]
        %v248 = vld [vmem:[%s192 + $0x68] sm:$0xff]
        %v249 = vld [vmem:[%s192 + $0x70] sm:$0xff]
        %v250 = vld [vmem:[%s192 + $0x78] sm:$0xff]
        %v251 = vld [vmem:[%s192 + $0x80] sm:$0xff]
        %v252 = vld [vmem:[%s192 + $0x88] sm:$0xff]
        %v253 = vld [vmem:[%s192 + $0x90] sm:$0xff]
        %v254 = vld [vmem:[%s192 + $0x98] sm:$0xff]
        %v255 = vld [vmem:[%s192 + $0xa0] sm:$0xff]
        %v256 = vld [vmem:[%s192 + $0xa8] sm:$0xff]
        %v257 = vld [vmem:[%s192 + $0xb0] sm:$0xff]
        %v258 = vld [vmem:[%s192 + $0xb8] sm:$0xff]
        %v259 = vld [vmem:[%s192 + $0xc0] sm:$0xff]
        %v260 = vld [vmem:[%s192 + $0xc8] sm:$0xff]
        %v261 = vld [vmem:[%s192 + $0xd0] sm:$0xff]
        %v262 = vld [vmem:[%s192 + $0xd8] sm:$0xff]
        %v263 = vld [vmem:[%s192 + $0xe0] sm:$0xff]
        %v264 = vld [vmem:[%s192 + $0xe8] sm:$0xff]
        %v265 = vld [vmem:[%s192 + $0xf0] sm:$0xff]
        %v266 = vld [vmem:[%s192 + $0xf8] sm:$0xff]
        %v267 = vld [vmem:[%s192 + $0x100] sm:$0xff]
        %v268 = vld [vmem:[%s192 + $0x108] sm:$0xff]
        %v269 = vld [vmem:[%s192 + $0x110] sm:$0xff]
        %v270 = vld [vmem:[%s192 + $0x118] sm:$0xff]
        %v271 = vld [vmem:[%s192 + $0x120] sm:$0xff]
        %v272 = vld [vmem:[%s192 + $0x128] sm:$0xff]
        %v273 = vld [vmem:[%s192 + $0x130] sm:$0xff]
        %v274 = vld [vmem:[%s192 + $0x138] sm:$0xff]
        %v275 = vld [vmem:[%s192 + $0x140] sm:$0xff]
        %v276 = vld [vmem:[%s192 + $0x148] sm:$0xff]
        %v277 = vld [vmem:[%s192 + $0x150] sm:$0xff]
        %v278 = vld [vmem:[%s192 + $0x158] sm:$0xff]
        %v279 = vld [vmem:[%s192 + $0x160] sm:$0xff]
        %v280 = vld [vmem:[%s192 + $0x168] sm:$0xff]
        %v281 = vld [vmem:[%s192 + $0x170] sm:$0xff]
        %v282 = vld [vmem:[%s192 + $0x178] sm:$0xff]
        %v283 = vld [vmem:[%s192 + $0x180] sm:$0xff]
        %v284 = vld [vmem:[%s192 + $0x188] sm:$0xff]
        %v285 = vld [vmem:[%s192 + $0x190] sm:$0xff]
        %v286 = vld [vmem:[%s192 + $0x198] sm:$0xff]
        %v287 = vld [vmem:[%s192 + $0x1a0] sm:$0xff]
        %v288 = vld [vmem:[%s192 + $0x1a8] sm:$0xff]
        %v289 = vld [vmem:[%s192 + $0x1b0] sm:$0xff]
        %v290 = vld [vmem:[%s192 + $0x1b8] sm:$0xff]
        %v291 = vld [vmem:[%s192 + $0x1c0] sm:$0xff]
        %v292 = vld [vmem:[%s192 + $0x1c8] sm:$0xff]
        %v293 = vld [vmem:[%s192 + $0x1d0] sm:$0xff]
        %v294 = vld [vmem:[%s192 + $0x1d8] sm:$0xff]
        %v295 = vld [vmem:[%s192 + $0x1e0] sm:$0xff]
        %v296 = vld [vmem:[%s192 + $0x1e8] sm:$0xff]
        %v297 = vld [vmem:[%s192 + $0x1f0] sm:$0xff]
        %v298 = vld [vmem:[%s192 + $0x1f8] sm:$0xff]
        %s299 = smul.u32 %s22, 512
        %s300 = sshra.s32 %s299, 3
        %s301 = sand.u32 %s299, 7
        %s302 = smul.addr %s300, 4
        %s303 = scalar_lea.vmem %s1, %s302
        %v304 = vld [vmem:[%s303] sm:$0xf]
        %v305 = vld [vmem:[%s303 + $0x4] sm:$0xf]
        %v306 = vld [vmem:[%s303 + $0x8] sm:$0xf]
        %v307 = vld [vmem:[%s303 + $0xc] sm:$0xf]
        %v308 = vld [vmem:[%s303 + $0x10] sm:$0xf]
        %v309 = vld [vmem:[%s303 + $0x14] sm:$0xf]
        %v310 = vld [vmem:[%s303 + $0x18] sm:$0xf]
        %v311 = vld [vmem:[%s303 + $0x1c] sm:$0xf]
        %v312 = vld [vmem:[%s303 + $0x20] sm:$0xf]
        %v313 = vld [vmem:[%s303 + $0x24] sm:$0xf]
        %v314 = vld [vmem:[%s303 + $0x28] sm:$0xf]
        %v315 = vld [vmem:[%s303 + $0x2c] sm:$0xf]
        %v316 = vld [vmem:[%s303 + $0x30] sm:$0xf]
        %v317 = vld [vmem:[%s303 + $0x34] sm:$0xf]
        %v318 = vld [vmem:[%s303 + $0x38] sm:$0xf]
        %v319 = vld [vmem:[%s303 + $0x3c] sm:$0xf]
        %v320 = vld [vmem:[%s303 + $0x40] sm:$0xf]
        %v321 = vld [vmem:[%s303 + $0x44] sm:$0xf]
        %v322 = vld [vmem:[%s303 + $0x48] sm:$0xf]
        %v323 = vld [vmem:[%s303 + $0x4c] sm:$0xf]
        %v324 = vld [vmem:[%s303 + $0x50] sm:$0xf]
        %v325 = vld [vmem:[%s303 + $0x54] sm:$0xf]
        %v326 = vld [vmem:[%s303 + $0x58] sm:$0xf]
        %v327 = vld [vmem:[%s303 + $0x5c] sm:$0xf]
        %v328 = vld [vmem:[%s303 + $0x60] sm:$0xf]
        %v329 = vld [vmem:[%s303 + $0x64] sm:$0xf]
        %v330 = vld [vmem:[%s303 + $0x68] sm:$0xf]
        %v331 = vld [vmem:[%s303 + $0x6c] sm:$0xf]
        %v332 = vld [vmem:[%s303 + $0x70] sm:$0xf]
        %v333 = vld [vmem:[%s303 + $0x74] sm:$0xf]
        %v334 = vld [vmem:[%s303 + $0x78] sm:$0xf]
        %v335 = vld [vmem:[%s303 + $0x7c] sm:$0xf]
        %v336 = vld [vmem:[%s303 + $0x80] sm:$0xf]
        %v337 = vld [vmem:[%s303 + $0x84] sm:$0xf]
        %v338 = vld [vmem:[%s303 + $0x88] sm:$0xf]
        %v339 = vld [vmem:[%s303 + $0x8c] sm:$0xf]
        %v340 = vld [vmem:[%s303 + $0x90] sm:$0xf]
        %v341 = vld [vmem:[%s303 + $0x94] sm:$0xf]
        %v342 = vld [vmem:[%s303 + $0x98] sm:$0xf]
        %v343 = vld [vmem:[%s303 + $0x9c] sm:$0xf]
        %v344 = vld [vmem:[%s303 + $0xa0] sm:$0xf]
        %v345 = vld [vmem:[%s303 + $0xa4] sm:$0xf]
        %v346 = vld [vmem:[%s303 + $0xa8] sm:$0xf]
        %v347 = vld [vmem:[%s303 + $0xac] sm:$0xf]
        %v348 = vld [vmem:[%s303 + $0xb0] sm:$0xf]
        %v349 = vld [vmem:[%s303 + $0xb4] sm:$0xf]
        %v350 = vld [vmem:[%s303 + $0xb8] sm:$0xf]
        %v351 = vld [vmem:[%s303 + $0xbc] sm:$0xf]
        %v352 = vld [vmem:[%s303 + $0xc0] sm:$0xf]
        %v353 = vld [vmem:[%s303 + $0xc4] sm:$0xf]
        %v354 = vld [vmem:[%s303 + $0xc8] sm:$0xf]
        %v355 = vld [vmem:[%s303 + $0xcc] sm:$0xf]
        %v356 = vld [vmem:[%s303 + $0xd0] sm:$0xf]
        %v357 = vld [vmem:[%s303 + $0xd4] sm:$0xf]
        %v358 = vld [vmem:[%s303 + $0xd8] sm:$0xf]
        %v359 = vld [vmem:[%s303 + $0xdc] sm:$0xf]
        %v360 = vld [vmem:[%s303 + $0xe0] sm:$0xf]
        %v361 = vld [vmem:[%s303 + $0xe4] sm:$0xf]
        %v362 = vld [vmem:[%s303 + $0xe8] sm:$0xf]
        %v363 = vld [vmem:[%s303 + $0xec] sm:$0xf]
        %v364 = vld [vmem:[%s303 + $0xf0] sm:$0xf]
        %v365 = vld [vmem:[%s303 + $0xf4] sm:$0xf]
        %v366 = vld [vmem:[%s303 + $0xf8] sm:$0xf]
        %v367 = vld [vmem:[%s303 + $0xfc] sm:$0xf]
        %v432 = vunpack.c.l.b16 %v235
        %v433 = vunpack.c.h.b16 %v235
        %v434 = vunpack.c.l.b16 %v236
        %v435 = vunpack.c.h.b16 %v236
        %v436 = vunpack.c.l.b16 %v237
        %v437 = vunpack.c.h.b16 %v237
        %v438 = vunpack.c.l.b16 %v238
        %v439 = vunpack.c.h.b16 %v238
        %v440 = vunpack.c.l.b16 %v239
        %v441 = vunpack.c.h.b16 %v239
        %v442 = vunpack.c.l.b16 %v240
        %v443 = vunpack.c.h.b16 %v240
        %v444 = vunpack.c.l.b16 %v241
        %v445 = vunpack.c.h.b16 %v241
        %v446 = vunpack.c.l.b16 %v242
        %v447 = vunpack.c.h.b16 %v242
        %v448 = vunpack.c.l.b16 %v243
        %v449 = vunpack.c.h.b16 %v243
        %v450 = vunpack.c.l.b16 %v244
        %v451 = vunpack.c.h.b16 %v244
        %v452 = vunpack.c.l.b16 %v245
        %v453 = vunpack.c.h.b16 %v245
        %v454 = vunpack.c.l.b16 %v246
        %v455 = vunpack.c.h.b16 %v246
        %v456 = vunpack.c.l.b16 %v247
        %v457 = vunpack.c.h.b16 %v247
        %v458 = vunpack.c.l.b16 %v248
        %v459 = vunpack.c.h.b16 %v248
        %v460 = vunpack.c.l.b16 %v249
        %v461 = vunpack.c.h.b16 %v249
        %v462 = vunpack.c.l.b16 %v250
        %v463 = vunpack.c.h.b16 %v250
        %v464 = vunpack.c.l.b16 %v251
        %v465 = vunpack.c.h.b16 %v251
        %v466 = vunpack.c.l.b16 %v252
        %v467 = vunpack.c.h.b16 %v252
        %v468 = vunpack.c.l.b16 %v253
        %v469 = vunpack.c.h.b16 %v253
        %v470 = vunpack.c.l.b16 %v254
        %v471 = vunpack.c.h.b16 %v254
        %v472 = vunpack.c.l.b16 %v255
        %v473 = vunpack.c.h.b16 %v255
        %v474 = vunpack.c.l.b16 %v256
        %v475 = vunpack.c.h.b16 %v256
        %v476 = vunpack.c.l.b16 %v257
        %v477 = vunpack.c.h.b16 %v257
        %v478 = vunpack.c.l.b16 %v258
        %v479 = vunpack.c.h.b16 %v258
        %v480 = vunpack.c.l.b16 %v259
        %v481 = vunpack.c.h.b16 %v259
        %v482 = vunpack.c.l.b16 %v260
        %v483 = vunpack.c.h.b16 %v260
        %v484 = vunpack.c.l.b16 %v261
        %v485 = vunpack.c.h.b16 %v261
        %v486 = vunpack.c.l.b16 %v262
        %v487 = vunpack.c.h.b16 %v262
        %v488 = vunpack.c.l.b16 %v263
        %v489 = vunpack.c.h.b16 %v263
        %v490 = vunpack.c.l.b16 %v264
        %v491 = vunpack.c.h.b16 %v264
        %v492 = vunpack.c.l.b16 %v265
        %v493 = vunpack.c.h.b16 %v265
        %v494 = vunpack.c.l.b16 %v266
        %v495 = vunpack.c.h.b16 %v266
        %v496 = vunpack.c.l.b16 %v267
        %v497 = vunpack.c.h.b16 %v267
        %v498 = vunpack.c.l.b16 %v268
        %v499 = vunpack.c.h.b16 %v268
        %v500 = vunpack.c.l.b16 %v269
        %v501 = vunpack.c.h.b16 %v269
        %v502 = vunpack.c.l.b16 %v270
        %v503 = vunpack.c.h.b16 %v270
        %v504 = vunpack.c.l.b16 %v271
        %v505 = vunpack.c.h.b16 %v271
        %v506 = vunpack.c.l.b16 %v272
        %v507 = vunpack.c.h.b16 %v272
        %v508 = vunpack.c.l.b16 %v273
        %v509 = vunpack.c.h.b16 %v273
        %v510 = vunpack.c.l.b16 %v274
        %v511 = vunpack.c.h.b16 %v274
        %v512 = vunpack.c.l.b16 %v275
        %v513 = vunpack.c.h.b16 %v275
        %v514 = vunpack.c.l.b16 %v276
        %v515 = vunpack.c.h.b16 %v276
        %v516 = vunpack.c.l.b16 %v277
        %v517 = vunpack.c.h.b16 %v277
        %v518 = vunpack.c.l.b16 %v278
        %v519 = vunpack.c.h.b16 %v278
        %v520 = vunpack.c.l.b16 %v279
        %v521 = vunpack.c.h.b16 %v279
        %v522 = vunpack.c.l.b16 %v280
        %v523 = vunpack.c.h.b16 %v280
        %v524 = vunpack.c.l.b16 %v281
        %v525 = vunpack.c.h.b16 %v281
        %v526 = vunpack.c.l.b16 %v282
        %v527 = vunpack.c.h.b16 %v282
        %v528 = vunpack.c.l.b16 %v283
        %v529 = vunpack.c.h.b16 %v283
        %v530 = vunpack.c.l.b16 %v284
        %v531 = vunpack.c.h.b16 %v284
        %v532 = vunpack.c.l.b16 %v285
        %v533 = vunpack.c.h.b16 %v285
        %v534 = vunpack.c.l.b16 %v286
        %v535 = vunpack.c.h.b16 %v286
        %v536 = vunpack.c.l.b16 %v287
        %v537 = vunpack.c.h.b16 %v287
        %v538 = vunpack.c.l.b16 %v288
        %v539 = vunpack.c.h.b16 %v288
        %v540 = vunpack.c.l.b16 %v289
        %v541 = vunpack.c.h.b16 %v289
        %v542 = vunpack.c.l.b16 %v290
        %v543 = vunpack.c.h.b16 %v290
        %v544 = vunpack.c.l.b16 %v291
        %v545 = vunpack.c.h.b16 %v291
        %v546 = vunpack.c.l.b16 %v292
        %v547 = vunpack.c.h.b16 %v292
        %v548 = vunpack.c.l.b16 %v293
        %v549 = vunpack.c.h.b16 %v293
        %v550 = vunpack.c.l.b16 %v294
        %v551 = vunpack.c.h.b16 %v294
        %v552 = vunpack.c.l.b16 %v295
        %v553 = vunpack.c.h.b16 %v295
        %v554 = vunpack.c.l.b16 %v296
        %v555 = vunpack.c.h.b16 %v296
        %v556 = vunpack.c.l.b16 %v297
        %v557 = vunpack.c.h.b16 %v297
        %v558 = vunpack.c.l.b16 %v298
        %v559 = vunpack.c.h.b16 %v298
        %v560 = vpack.c.b16 %v436, %v432
        %v561 = vpack.c.b16 %v437, %v433
        %v562 = vpack.c.b16 %v438, %v434
        %v563 = vpack.c.b16 %v439, %v435
        %v564 = vpack.c.b16 %v444, %v440
        %v565 = vpack.c.b16 %v445, %v441
        %v566 = vpack.c.b16 %v446, %v442
        %v567 = vpack.c.b16 %v447, %v443
        %v568 = vpack.c.b16 %v452, %v448
        %v569 = vpack.c.b16 %v453, %v449
        %v570 = vpack.c.b16 %v454, %v450
        %v571 = vpack.c.b16 %v455, %v451
        %v572 = vpack.c.b16 %v460, %v456
        %v573 = vpack.c.b16 %v461, %v457
        %v574 = vpack.c.b16 %v462, %v458
        %v575 = vpack.c.b16 %v463, %v459
        %v576 = vpack.c.b16 %v468, %v464
        %v577 = vpack.c.b16 %v469, %v465
        %v578 = vpack.c.b16 %v470, %v466
        %v579 = vpack.c.b16 %v471, %v467
        %v580 = vpack.c.b16 %v476, %v472
        %v581 = vpack.c.b16 %v477, %v473
        %v582 = vpack.c.b16 %v478, %v474
        %v583 = vpack.c.b16 %v479, %v475
        %v584 = vpack.c.b16 %v484, %v480
        %v585 = vpack.c.b16 %v485, %v481
        %v586 = vpack.c.b16 %v486, %v482
        %v587 = vpack.c.b16 %v487, %v483
        %v588 = vpack.c.b16 %v492, %v488
        %v589 = vpack.c.b16 %v493, %v489
        %v590 = vpack.c.b16 %v494, %v490
        %v591 = vpack.c.b16 %v495, %v491
        %v592 = vpack.c.b16 %v500, %v496
        %v593 = vpack.c.b16 %v501, %v497
        %v594 = vpack.c.b16 %v502, %v498
        %v595 = vpack.c.b16 %v503, %v499
        %v596 = vpack.c.b16 %v508, %v504
        %v597 = vpack.c.b16 %v509, %v505
        %v598 = vpack.c.b16 %v510, %v506
        %v599 = vpack.c.b16 %v511, %v507
        %v600 = vpack.c.b16 %v516, %v512
        %v601 = vpack.c.b16 %v517, %v513
        %v602 = vpack.c.b16 %v518, %v514
        %v603 = vpack.c.b16 %v519, %v515
        %v604 = vpack.c.b16 %v524, %v520
        %v605 = vpack.c.b16 %v525, %v521
        %v606 = vpack.c.b16 %v526, %v522
        %v607 = vpack.c.b16 %v527, %v523
        %v608 = vpack.c.b16 %v532, %v528
        %v609 = vpack.c.b16 %v533, %v529
        %v610 = vpack.c.b16 %v534, %v530
        %v611 = vpack.c.b16 %v535, %v531
        %v612 = vpack.c.b16 %v540, %v536
        %v613 = vpack.c.b16 %v541, %v537
        %v614 = vpack.c.b16 %v542, %v538
        %v615 = vpack.c.b16 %v543, %v539
        %v616 = vpack.c.b16 %v548, %v544
        %v617 = vpack.c.b16 %v549, %v545
        %v618 = vpack.c.b16 %v550, %v546
        %v619 = vpack.c.b16 %v551, %v547
        %v620 = vpack.c.b16 %v556, %v552
        %v621 = vpack.c.b16 %v557, %v553
        %v622 = vpack.c.b16 %v558, %v554
        %v623 = vpack.c.b16 %v559, %v555
        %v752 = vunpack.c.l.b16 %v304
        %v753 = vunpack.c.l.b16 %v305
        %v754 = vunpack.c.l.b16 %v306
        %v755 = vunpack.c.l.b16 %v307
        %v756 = vunpack.c.l.b16 %v308
        %v757 = vunpack.c.l.b16 %v309
        %v758 = vunpack.c.l.b16 %v310
        %v759 = vunpack.c.l.b16 %v311
        %v760 = vunpack.c.l.b16 %v312
        %v761 = vunpack.c.l.b16 %v313
        %v762 = vunpack.c.l.b16 %v314
        %v763 = vunpack.c.l.b16 %v315
        %v764 = vunpack.c.l.b16 %v316
        %v765 = vunpack.c.l.b16 %v317
        %v766 = vunpack.c.l.b16 %v318
        %v767 = vunpack.c.l.b16 %v319
        %v768 = vunpack.c.l.b16 %v320
        %v769 = vunpack.c.l.b16 %v321
        %v770 = vunpack.c.l.b16 %v322
        %v771 = vunpack.c.l.b16 %v323
        %v772 = vunpack.c.l.b16 %v324
        %v773 = vunpack.c.l.b16 %v325
        %v774 = vunpack.c.l.b16 %v326
        %v775 = vunpack.c.l.b16 %v327
        %v776 = vunpack.c.l.b16 %v328
        %v777 = vunpack.c.l.b16 %v329
        %v778 = vunpack.c.l.b16 %v330
        %v779 = vunpack.c.l.b16 %v331
        %v780 = vunpack.c.l.b16 %v332
        %v781 = vunpack.c.l.b16 %v333
        %v782 = vunpack.c.l.b16 %v334
        %v783 = vunpack.c.l.b16 %v335
        %v784 = vunpack.c.l.b16 %v336
        %v785 = vunpack.c.l.b16 %v337
        %v786 = vunpack.c.l.b16 %v338
        %v787 = vunpack.c.l.b16 %v339
        %v788 = vunpack.c.l.b16 %v340
        %v789 = vunpack.c.l.b16 %v341
        %v790 = vunpack.c.l.b16 %v342
        %v791 = vunpack.c.l.b16 %v343
        %v792 = vunpack.c.l.b16 %v344
        %v793 = vunpack.c.l.b16 %v345
        %v794 = vunpack.c.l.b16 %v346
        %v795 = vunpack.c.l.b16 %v347
        %v796 = vunpack.c.l.b16 %v348
        %v797 = vunpack.c.l.b16 %v349
        %v798 = vunpack.c.l.b16 %v350
        %v799 = vunpack.c.l.b16 %v351
        %v800 = vunpack.c.l.b16 %v352
        %v801 = vunpack.c.l.b16 %v353
        %v802 = vunpack.c.l.b16 %v354
        %v803 = vunpack.c.l.b16 %v355
        %v804 = vunpack.c.l.b16 %v356
        %v805 = vunpack.c.l.b16 %v357
        %v806 = vunpack.c.l.b16 %v358
        %v807 = vunpack.c.l.b16 %v359
        %v808 = vunpack.c.l.b16 %v360
        %v809 = vunpack.c.l.b16 %v361
        %v810 = vunpack.c.l.b16 %v362
        %v811 = vunpack.c.l.b16 %v363
        %v812 = vunpack.c.l.b16 %v364
        %v813 = vunpack.c.l.b16 %v365
        %v814 = vunpack.c.l.b16 %v366
        %v815 = vunpack.c.l.b16 %v367
        %v816 = vpack.c.b16 %v753, %v752
        %v817 = vpack.c.b16 %v755, %v754
        %v818 = vpack.c.b16 %v757, %v756
        %v819 = vpack.c.b16 %v759, %v758
        %v820 = vpack.c.b16 %v761, %v760
        %v821 = vpack.c.b16 %v763, %v762
        %v822 = vpack.c.b16 %v765, %v764
        %v823 = vpack.c.b16 %v767, %v766
        %v824 = vpack.c.b16 %v769, %v768
        %v825 = vpack.c.b16 %v771, %v770
        %v826 = vpack.c.b16 %v773, %v772
        %v827 = vpack.c.b16 %v775, %v774
        %v828 = vpack.c.b16 %v777, %v776
        %v829 = vpack.c.b16 %v779, %v778
        %v830 = vpack.c.b16 %v781, %v780
        %v831 = vpack.c.b16 %v783, %v782
        %v832 = vpack.c.b16 %v785, %v784
        %v833 = vpack.c.b16 %v787, %v786
        %v834 = vpack.c.b16 %v789, %v788
        %v835 = vpack.c.b16 %v791, %v790
        %v836 = vpack.c.b16 %v793, %v792
        %v837 = vpack.c.b16 %v795, %v794
        %v838 = vpack.c.b16 %v797, %v796
        %v839 = vpack.c.b16 %v799, %v798
        %v840 = vpack.c.b16 %v801, %v800
        %v841 = vpack.c.b16 %v803, %v802
        %v842 = vpack.c.b16 %v805, %v804
        %v843 = vpack.c.b16 %v807, %v806
        %v844 = vpack.c.b16 %v809, %v808
        %v845 = vpack.c.b16 %v811, %v810
        %v846 = vpack.c.b16 %v813, %v812
        %v847 = vpack.c.b16 %v815, %v814
        %880 = vmatpush.bf16.msra.mxu0 %v823
        %881 = vmatpush.bf16.msra.mxu0 %v822
        %882 = vmatpush.bf16.msra.mxu0 %v821
        %883 = vmatpush.bf16.msra.mxu0 %v820
        %884 = vmatpush.bf16.msra.mxu0 %v819
        %885 = vmatpush.bf16.msra.mxu0 %v818
        %886 = vmatpush.bf16.msra.mxu0 %v817
        %887 = vmatpush.bf16.msra.mxu0 %v816
        %888 = vmatmul.bf16.gmra.mxu0 %v560
        %v889 = vpop.f32.mrf.mxu0
        %v890 = vadd.f32 0.0, %v889
        %v891 = vpop.f32.mrf.mxu0
        %v892 = vadd.f32 0.0, %v891
        %893 = vmatmul.bf16.gmra.mxu0 %v564
        %v894 = vpop.f32.mrf.mxu0
        %v895 = vadd.f32 0.0, %v894
        %v896 = vpop.f32.mrf.mxu0
        %v897 = vadd.f32 0.0, %v896
        %898 = vmatmul.bf16.gmra.mxu0 %v568
        %v899 = vpop.f32.mrf.mxu0
        %v900 = vadd.f32 0.0, %v899
        %v901 = vpop.f32.mrf.mxu0
        %v902 = vadd.f32 0.0, %v901
        %903 = vmatmul.bf16.gmra.mxu0 %v572
        %v904 = vpop.f32.mrf.mxu0
        %v905 = vadd.f32 0.0, %v904
        %v906 = vpop.f32.mrf.mxu0
        %v907 = vadd.f32 0.0, %v906
        %908 = vmatmul.bf16.gmra.mxu0 %v576
        %v909 = vpop.f32.mrf.mxu0
        %v910 = vadd.f32 0.0, %v909
        %v911 = vpop.f32.mrf.mxu0
        %v912 = vadd.f32 0.0, %v911
        %913 = vmatmul.bf16.gmra.mxu0 %v580
        %v914 = vpop.f32.mrf.mxu0
        %v915 = vadd.f32 0.0, %v914
        %v916 = vpop.f32.mrf.mxu0
        %v917 = vadd.f32 0.0, %v916
        %918 = vmatmul.bf16.gmra.mxu0 %v584
        %v919 = vpop.f32.mrf.mxu0
        %v920 = vadd.f32 0.0, %v919
        %v921 = vpop.f32.mrf.mxu0
        %v922 = vadd.f32 0.0, %v921
        %923 = vmatmul.bf16.gmra.mxu0 %v588
        %v924 = vpop.f32.mrf.mxu0
        %v925 = vadd.f32 0.0, %v924
        %v926 = vpop.f32.mrf.mxu0
        %v927 = vadd.f32 0.0, %v926
        %928 = vmatmul.bf16.gmra.mxu0 %v592
        %v929 = vpop.f32.mrf.mxu0
        %v930 = vadd.f32 0.0, %v929
        %v931 = vpop.f32.mrf.mxu0
        %v932 = vadd.f32 0.0, %v931
        %933 = vmatmul.bf16.gmra.mxu0 %v596
        %v934 = vpop.f32.mrf.mxu0
        %v935 = vadd.f32 0.0, %v934
        %v936 = vpop.f32.mrf.mxu0
        %v937 = vadd.f32 0.0, %v936
        %938 = vmatmul.bf16.gmra.mxu0 %v600
        %v939 = vpop.f32.mrf.mxu0
        %v940 = vadd.f32 0.0, %v939
        %v941 = vpop.f32.mrf.mxu0
        %v942 = vadd.f32 0.0, %v941
        %943 = vmatmul.bf16.gmra.mxu0 %v604
        %v944 = vpop.f32.mrf.mxu0
        %v945 = vadd.f32 0.0, %v944
        %v946 = vpop.f32.mrf.mxu0
        %v947 = vadd.f32 0.0, %v946
        %948 = vmatmul.bf16.gmra.mxu0 %v608
        %v949 = vpop.f32.mrf.mxu0
        %v950 = vadd.f32 0.0, %v949
        %v951 = vpop.f32.mrf.mxu0
        %v952 = vadd.f32 0.0, %v951
        %953 = vmatmul.bf16.gmra.mxu0 %v612
        %v954 = vpop.f32.mrf.mxu0
        %v955 = vadd.f32 0.0, %v954
        %v956 = vpop.f32.mrf.mxu0
        %v957 = vadd.f32 0.0, %v956
        %958 = vmatmul.bf16.gmra.mxu0 %v616
        %v959 = vpop.f32.mrf.mxu0
        %v960 = vadd.f32 0.0, %v959
        %v961 = vpop.f32.mrf.mxu0
        %v962 = vadd.f32 0.0, %v961
        %963 = vmatmul.bf16.gmra.mxu0 %v620
        %v964 = vpop.f32.mrf.mxu0
        %v965 = vadd.f32 0.0, %v964
        %v966 = vpop.f32.mrf.mxu0
        %v967 = vadd.f32 0.0, %v966
        %968 = vdwg.mxu0
        %969 = vmatpush.bf16.msra.mxu0 %v831
        %970 = vmatpush.bf16.msra.mxu0 %v830
        %971 = vmatpush.bf16.msra.mxu0 %v829
        %972 = vmatpush.bf16.msra.mxu0 %v828
        %973 = vmatpush.bf16.msra.mxu0 %v827
        %974 = vmatpush.bf16.msra.mxu0 %v826
        %975 = vmatpush.bf16.msra.mxu0 %v825
        %976 = vmatpush.bf16.msra.mxu0 %v824
        %977 = vmatmul.bf16.gmra.mxu0 %v561
        %v978 = vpop.f32.mrf.mxu0
        %v979 = vadd.f32 %v890, %v978
        %v980 = vpop.f32.mrf.mxu0
        %v981 = vadd.f32 %v892, %v980
        %982 = vmatmul.bf16.gmra.mxu0 %v565
        %v983 = vpop.f32.mrf.mxu0
        %v984 = vadd.f32 %v895, %v983
        %v985 = vpop.f32.mrf.mxu0
        %v986 = vadd.f32 %v897, %v985
        %987 = vmatmul.bf16.gmra.mxu0 %v569
        %v988 = vpop.f32.mrf.mxu0
        %v989 = vadd.f32 %v900, %v988
        %v990 = vpop.f32.mrf.mxu0
        %v991 = vadd.f32 %v902, %v990
        %992 = vmatmul.bf16.gmra.mxu0 %v573
        %v993 = vpop.f32.mrf.mxu0
        %v994 = vadd.f32 %v905, %v993
        %v995 = vpop.f32.mrf.mxu0
        %v996 = vadd.f32 %v907, %v995
        %997 = vmatmul.bf16.gmra.mxu0 %v577
        %v998 = vpop.f32.mrf.mxu0
        %v999 = vadd.f32 %v910, %v998
        %v1000 = vpop.f32.mrf.mxu0
        %v1001 = vadd.f32 %v912, %v1000
        %1002 = vmatmul.bf16.gmra.mxu0 %v581
        %v1003 = vpop.f32.mrf.mxu0
        %v1004 = vadd.f32 %v915, %v1003
        %v1005 = vpop.f32.mrf.mxu0
        %v1006 = vadd.f32 %v917, %v1005
        %1007 = vmatmul.bf16.gmra.mxu0 %v585
        %v1008 = vpop.f32.mrf.mxu0
        %v1009 = vadd.f32 %v920, %v1008
        %v1010 = vpop.f32.mrf.mxu0
        %v1011 = vadd.f32 %v922, %v1010
        %1012 = vmatmul.bf16.gmra.mxu0 %v589
        %v1013 = vpop.f32.mrf.mxu0
        %v1014 = vadd.f32 %v925, %v1013
        %v1015 = vpop.f32.mrf.mxu0
        %v1016 = vadd.f32 %v927, %v1015
        %1017 = vmatmul.bf16.gmra.mxu0 %v593
        %v1018 = vpop.f32.mrf.mxu0
        %v1019 = vadd.f32 %v930, %v1018
        %v1020 = vpop.f32.mrf.mxu0
        %v1021 = vadd.f32 %v932, %v1020
        %1022 = vmatmul.bf16.gmra.mxu0 %v597
        %v1023 = vpop.f32.mrf.mxu0
        %v1024 = vadd.f32 %v935, %v1023
        %v1025 = vpop.f32.mrf.mxu0
        %v1026 = vadd.f32 %v937, %v1025
        %1027 = vmatmul.bf16.gmra.mxu0 %v601
        %v1028 = vpop.f32.mrf.mxu0
        %v1029 = vadd.f32 %v940, %v1028
        %v1030 = vpop.f32.mrf.mxu0
        %v1031 = vadd.f32 %v942, %v1030
        %1032 = vmatmul.bf16.gmra.mxu0 %v605
        %v1033 = vpop.f32.mrf.mxu0
        %v1034 = vadd.f32 %v945, %v1033
        %v1035 = vpop.f32.mrf.mxu0
        %v1036 = vadd.f32 %v947, %v1035
        %1037 = vmatmul.bf16.gmra.mxu0 %v609
        %v1038 = vpop.f32.mrf.mxu0
        %v1039 = vadd.f32 %v950, %v1038
        %v1040 = vpop.f32.mrf.mxu0
        %v1041 = vadd.f32 %v952, %v1040
        %1042 = vmatmul.bf16.gmra.mxu0 %v613
        %v1043 = vpop.f32.mrf.mxu0
        %v1044 = vadd.f32 %v955, %v1043
        %v1045 = vpop.f32.mrf.mxu0
        %v1046 = vadd.f32 %v957, %v1045
        %1047 = vmatmul.bf16.gmra.mxu0 %v617
        %v1048 = vpop.f32.mrf.mxu0
        %v1049 = vadd.f32 %v960, %v1048
        %v1050 = vpop.f32.mrf.mxu0
        %v1051 = vadd.f32 %v962, %v1050
        %1052 = vmatmul.bf16.gmra.mxu0 %v621
        %v1053 = vpop.f32.mrf.mxu0
        %v1054 = vadd.f32 %v965, %v1053
        %v1055 = vpop.f32.mrf.mxu0
        %v1056 = vadd.f32 %v967, %v1055
        %1057 = vdwg.mxu0
        %1058 = vmatpush.bf16.msra.mxu0 %v839
        %1059 = vmatpush.bf16.msra.mxu0 %v838
        %1060 = vmatpush.bf16.msra.mxu0 %v837
        %1061 = vmatpush.bf16.msra.mxu0 %v836
        %1062 = vmatpush.bf16.msra.mxu0 %v835
        %1063 = vmatpush.bf16.msra.mxu0 %v834
        %1064 = vmatpush.bf16.msra.mxu0 %v833
        %1065 = vmatpush.bf16.msra.mxu0 %v832
        %1066 = vmatmul.bf16.gmra.mxu0 %v562
        %v1067 = vpop.f32.mrf.mxu0
        %v1068 = vadd.f32 %v979, %v1067
        %v1069 = vpop.f32.mrf.mxu0
        %v1070 = vadd.f32 %v981, %v1069
        %1071 = vmatmul.bf16.gmra.mxu0 %v566
        %v1072 = vpop.f32.mrf.mxu0
        %v1073 = vadd.f32 %v984, %v1072
        %v1074 = vpop.f32.mrf.mxu0
        %v1075 = vadd.f32 %v986, %v1074
        %1076 = vmatmul.bf16.gmra.mxu0 %v570
        %v1077 = vpop.f32.mrf.mxu0
        %v1078 = vadd.f32 %v989, %v1077
        %v1079 = vpop.f32.mrf.mxu0
        %v1080 = vadd.f32 %v991, %v1079
        %1081 = vmatmul.bf16.gmra.mxu0 %v574
        %v1082 = vpop.f32.mrf.mxu0
        %v1083 = vadd.f32 %v994, %v1082
        %v1084 = vpop.f32.mrf.mxu0
        %v1085 = vadd.f32 %v996, %v1084
        %1086 = vmatmul.bf16.gmra.mxu0 %v578
        %v1087 = vpop.f32.mrf.mxu0
        %v1088 = vadd.f32 %v999, %v1087
        %v1089 = vpop.f32.mrf.mxu0
        %v1090 = vadd.f32 %v1001, %v1089
        %1091 = vmatmul.bf16.gmra.mxu0 %v582
        %v1092 = vpop.f32.mrf.mxu0
        %v1093 = vadd.f32 %v1004, %v1092
        %v1094 = vpop.f32.mrf.mxu0
        %v1095 = vadd.f32 %v1006, %v1094
        %1096 = vmatmul.bf16.gmra.mxu0 %v586
        %v1097 = vpop.f32.mrf.mxu0
        %v1098 = vadd.f32 %v1009, %v1097
        %v1099 = vpop.f32.mrf.mxu0
        %v1100 = vadd.f32 %v1011, %v1099
        %1101 = vmatmul.bf16.gmra.mxu0 %v590
        %v1102 = vpop.f32.mrf.mxu0
        %v1103 = vadd.f32 %v1014, %v1102
        %v1104 = vpop.f32.mrf.mxu0
        %v1105 = vadd.f32 %v1016, %v1104
        %1106 = vmatmul.bf16.gmra.mxu0 %v594
        %v1107 = vpop.f32.mrf.mxu0
        %v1108 = vadd.f32 %v1019, %v1107
        %v1109 = vpop.f32.mrf.mxu0
        %v1110 = vadd.f32 %v1021, %v1109
        %1111 = vmatmul.bf16.gmra.mxu0 %v598
        %v1112 = vpop.f32.mrf.mxu0
        %v1113 = vadd.f32 %v1024, %v1112
        %v1114 = vpop.f32.mrf.mxu0
        %v1115 = vadd.f32 %v1026, %v1114
        %1116 = vmatmul.bf16.gmra.mxu0 %v602
        %v1117 = vpop.f32.mrf.mxu0
        %v1118 = vadd.f32 %v1029, %v1117
        %v1119 = vpop.f32.mrf.mxu0
        %v1120 = vadd.f32 %v1031, %v1119
        %1121 = vmatmul.bf16.gmra.mxu0 %v606
        %v1122 = vpop.f32.mrf.mxu0
        %v1123 = vadd.f32 %v1034, %v1122
        %v1124 = vpop.f32.mrf.mxu0
        %v1125 = vadd.f32 %v1036, %v1124
        %1126 = vmatmul.bf16.gmra.mxu0 %v610
        %v1127 = vpop.f32.mrf.mxu0
        %v1128 = vadd.f32 %v1039, %v1127
        %v1129 = vpop.f32.mrf.mxu0
        %v1130 = vadd.f32 %v1041, %v1129
        %1131 = vmatmul.bf16.gmra.mxu0 %v614
        %v1132 = vpop.f32.mrf.mxu0
        %v1133 = vadd.f32 %v1044, %v1132
        %v1134 = vpop.f32.mrf.mxu0
        %v1135 = vadd.f32 %v1046, %v1134
        %1136 = vmatmul.bf16.gmra.mxu0 %v618
        %v1137 = vpop.f32.mrf.mxu0
        %v1138 = vadd.f32 %v1049, %v1137
        %v1139 = vpop.f32.mrf.mxu0
        %v1140 = vadd.f32 %v1051, %v1139
        %1141 = vmatmul.bf16.gmra.mxu0 %v622
        %v1142 = vpop.f32.mrf.mxu0
        %v1143 = vadd.f32 %v1054, %v1142
        %v1144 = vpop.f32.mrf.mxu0
        %v1145 = vadd.f32 %v1056, %v1144
        %1146 = vdwg.mxu0
        %1147 = vmatpush.bf16.msra.mxu0 %v847
        %1148 = vmatpush.bf16.msra.mxu0 %v846
        %1149 = vmatpush.bf16.msra.mxu0 %v845
        %1150 = vmatpush.bf16.msra.mxu0 %v844
        %1151 = vmatpush.bf16.msra.mxu0 %v843
        %1152 = vmatpush.bf16.msra.mxu0 %v842
        %1153 = vmatpush.bf16.msra.mxu0 %v841
        %1154 = vmatpush.bf16.msra.mxu0 %v840
        %1155 = vmatmul.bf16.gmra.mxu0 %v563
        %v1156 = vpop.f32.mrf.mxu0
        %v1157 = vadd.f32 %v1068, %v1156
        %v1158 = vpop.f32.mrf.mxu0
        %v1159 = vadd.f32 %v1070, %v1158
        %1160 = vmatmul.bf16.gmra.mxu0 %v567
        %v1161 = vpop.f32.mrf.mxu0
        %v1162 = vadd.f32 %v1073, %v1161
        %v1163 = vpop.f32.mrf.mxu0
        %v1164 = vadd.f32 %v1075, %v1163
        %1165 = vmatmul.bf16.gmra.mxu0 %v571
        %v1166 = vpop.f32.mrf.mxu0
        %v1167 = vadd.f32 %v1078, %v1166
        %v1168 = vpop.f32.mrf.mxu0
        %v1169 = vadd.f32 %v1080, %v1168
        %1170 = vmatmul.bf16.gmra.mxu0 %v575
        %v1171 = vpop.f32.mrf.mxu0
        %v1172 = vadd.f32 %v1083, %v1171
        %v1173 = vpop.f32.mrf.mxu0
        %v1174 = vadd.f32 %v1085, %v1173
        %1175 = vmatmul.bf16.gmra.mxu0 %v579
        %v1176 = vpop.f32.mrf.mxu0
        %v1177 = vadd.f32 %v1088, %v1176
        %v1178 = vpop.f32.mrf.mxu0
        %v1179 = vadd.f32 %v1090, %v1178
        %1180 = vmatmul.bf16.gmra.mxu0 %v583
        %v1181 = vpop.f32.mrf.mxu0
        %v1182 = vadd.f32 %v1093, %v1181
        %v1183 = vpop.f32.mrf.mxu0
        %v1184 = vadd.f32 %v1095, %v1183
        %1185 = vmatmul.bf16.gmra.mxu0 %v587
        %v1186 = vpop.f32.mrf.mxu0
        %v1187 = vadd.f32 %v1098, %v1186
        %v1188 = vpop.f32.mrf.mxu0
        %v1189 = vadd.f32 %v1100, %v1188
        %1190 = vmatmul.bf16.gmra.mxu0 %v591
        %v1191 = vpop.f32.mrf.mxu0
        %v1192 = vadd.f32 %v1103, %v1191
        %v1193 = vpop.f32.mrf.mxu0
        %v1194 = vadd.f32 %v1105, %v1193
        %1195 = vmatmul.bf16.gmra.mxu0 %v595
        %v1196 = vpop.f32.mrf.mxu0
        %v1197 = vadd.f32 %v1108, %v1196
        %v1198 = vpop.f32.mrf.mxu0
        %v1199 = vadd.f32 %v1110, %v1198
        %1200 = vmatmul.bf16.gmra.mxu0 %v599
        %v1201 = vpop.f32.mrf.mxu0
        %v1202 = vadd.f32 %v1113, %v1201
        %v1203 = vpop.f32.mrf.mxu0
        %v1204 = vadd.f32 %v1115, %v1203
        %1205 = vmatmul.bf16.gmra.mxu0 %v603
        %v1206 = vpop.f32.mrf.mxu0
        %v1207 = vadd.f32 %v1118, %v1206
        %v1208 = vpop.f32.mrf.mxu0
        %v1209 = vadd.f32 %v1120, %v1208
        %1210 = vmatmul.bf16.gmra.mxu0 %v607
        %v1211 = vpop.f32.mrf.mxu0
        %v1212 = vadd.f32 %v1123, %v1211
        %v1213 = vpop.f32.mrf.mxu0
        %v1214 = vadd.f32 %v1125, %v1213
        %1215 = vmatmul.bf16.gmra.mxu0 %v611
        %v1216 = vpop.f32.mrf.mxu0
        %v1217 = vadd.f32 %v1128, %v1216
        %v1218 = vpop.f32.mrf.mxu0
        %v1219 = vadd.f32 %v1130, %v1218
        %1220 = vmatmul.bf16.gmra.mxu0 %v615
        %v1221 = vpop.f32.mrf.mxu0
        %v1222 = vadd.f32 %v1133, %v1221
        %v1223 = vpop.f32.mrf.mxu0
        %v1224 = vadd.f32 %v1135, %v1223
        %1225 = vmatmul.bf16.gmra.mxu0 %v619
        %v1226 = vpop.f32.mrf.mxu0
        %v1227 = vadd.f32 %v1138, %v1226
        %v1228 = vpop.f32.mrf.mxu0
        %v1229 = vadd.f32 %v1140, %v1228
        %1230 = vmatmul.bf16.gmra.mxu0 %v623
        %v1231 = vpop.f32.mrf.mxu0
        %v1232 = vadd.f32 %v1143, %v1231
        %v1233 = vpop.f32.mrf.mxu0
        %v1234 = vadd.f32 %v1145, %v1233
        %1235 = vdwg.mxu0
        %p1236 = scmp.eq.s32.totalorder %s22, 0
        // Predicated region
        $region37: #{tpu_custom_call.1} parent=31 // pred_check
          %p1237 = pneg %p1236
        $region38: #{tpu_custom_call.1} parent=31 // pred_check_branch
          %1239 = sbr.rel (%p1237) target = $region40
        $region39: #{tpu_custom_call.1} parent=31 // pred_region
          %vm1240 = vcmask 261120
          %1241 = vst.msk [vmem:[%s233] sm:$0xff] %vm1240, 0.0
          %1242 = vst.msk [vmem:[%s233 + $0x8] sm:$0xff] %vm1240, 0.0
          %1243 = vst.msk [vmem:[%s233 + $0x10] sm:$0xff] %vm1240, 0.0
          %1244 = vst.msk [vmem:[%s233 + $0x18] sm:$0xff] %vm1240, 0.0
          %1245 = vst.msk [vmem:[%s233 + $0x20] sm:$0xff] %vm1240, 0.0
          %1246 = vst.msk [vmem:[%s233 + $0x28] sm:$0xff] %vm1240, 0.0
          %1247 = vst.msk [vmem:[%s233 + $0x30] sm:$0xff] %vm1240, 0.0
          %1248 = vst.msk [vmem:[%s233 + $0x38] sm:$0xff] %vm1240, 0.0
          %1249 = vst.msk [vmem:[%s233 + $0x40] sm:$0xff] %vm1240, 0.0
          %1250 = vst.msk [vmem:[%s233 + $0x48] sm:$0xff] %vm1240, 0.0
          %1251 = vst.msk [vmem:[%s233 + $0x50] sm:$0xff] %vm1240, 0.0
          %1252 = vst.msk [vmem:[%s233 + $0x58] sm:$0xff] %vm1240, 0.0
          %1253 = vst.msk [vmem:[%s233 + $0x60] sm:$0xff] %vm1240, 0.0
          %1254 = vst.msk [vmem:[%s233 + $0x68] sm:$0xff] %vm1240, 0.0
          %1255 = vst.msk [vmem:[%s233 + $0x70] sm:$0xff] %vm1240, 0.0
          %1256 = vst.msk [vmem:[%s233 + $0x78] sm:$0xff] %vm1240, 0.0
          %1257 = vst.msk [vmem:[%s233 + $0x80] sm:$0xff] %vm1240, 0.0
          %1258 = vst.msk [vmem:[%s233 + $0x88] sm:$0xff] %vm1240, 0.0
          %1259 = vst.msk [vmem:[%s233 + $0x90] sm:$0xff] %vm1240, 0.0
          %1260 = vst.msk [vmem:[%s233 + $0x98] sm:$0xff] %vm1240, 0.0
          %1261 = vst.msk [vmem:[%s233 + $0xa0] sm:$0xff] %vm1240, 0.0
          %1262 = vst.msk [vmem:[%s233 + $0xa8] sm:$0xff] %vm1240, 0.0
          %1263 = vst.msk [vmem:[%s233 + $0xb0] sm:$0xff] %vm1240, 0.0
          %1264 = vst.msk [vmem:[%s233 + $0xb8] sm:$0xff] %vm1240, 0.0
          %1265 = vst.msk [vmem:[%s233 + $0xc0] sm:$0xff] %vm1240, 0.0
          %1266 = vst.msk [vmem:[%s233 + $0xc8] sm:$0xff] %vm1240, 0.0
          %1267 = vst.msk [vmem:[%s233 + $0xd0] sm:$0xff] %vm1240, 0.0
          %1268 = vst.msk [vmem:[%s233 + $0xd8] sm:$0xff] %vm1240, 0.0
          %1269 = vst.msk [vmem:[%s233 + $0xe0] sm:$0xff] %vm1240, 0.0
          %1270 = vst.msk [vmem:[%s233 + $0xe8] sm:$0xff] %vm1240, 0.0
          %1271 = vst.msk [vmem:[%s233 + $0xf0] sm:$0xff] %vm1240, 0.0
          %1272 = vst.msk [vmem:[%s233 + $0xf8] sm:$0xff] %vm1240, 0.0
        $region40: #{tpu_custom_call.1} parent=31 // pred_fallthru
          _
        %v1273 = vld [vmem:[%s233] sm:$0xff]
        %v1274 = vld [vmem:[%s233 + $0x8] sm:$0xff]
        %v1275 = vld [vmem:[%s233 + $0x10] sm:$0xff]
        %v1276 = vld [vmem:[%s233 + $0x18] sm:$0xff]
        %v1277 = vld [vmem:[%s233 + $0x20] sm:$0xff]
        %v1278 = vld [vmem:[%s233 + $0x28] sm:$0xff]
        %v1279 = vld [vmem:[%s233 + $0x30] sm:$0xff]
        %v1280 = vld [vmem:[%s233 + $0x38] sm:$0xff]
        %v1281 = vld [vmem:[%s233 + $0x40] sm:$0xff]
        %v1282 = vld [vmem:[%s233 + $0x48] sm:$0xff]
        %v1283 = vld [vmem:[%s233 + $0x50] sm:$0xff]
        %v1284 = vld [vmem:[%s233 + $0x58] sm:$0xff]
        %v1285 = vld [vmem:[%s233 + $0x60] sm:$0xff]
        %v1286 = vld [vmem:[%s233 + $0x68] sm:$0xff]
        %v1287 = vld [vmem:[%s233 + $0x70] sm:$0xff]
        %v1288 = vld [vmem:[%s233 + $0x78] sm:$0xff]
        %v1289 = vld [vmem:[%s233 + $0x80] sm:$0xff]
        %v1290 = vld [vmem:[%s233 + $0x88] sm:$0xff]
        %v1291 = vld [vmem:[%s233 + $0x90] sm:$0xff]
        %v1292 = vld [vmem:[%s233 + $0x98] sm:$0xff]
        %v1293 = vld [vmem:[%s233 + $0xa0] sm:$0xff]
        %v1294 = vld [vmem:[%s233 + $0xa8] sm:$0xff]
        %v1295 = vld [vmem:[%s233 + $0xb0] sm:$0xff]
        %v1296 = vld [vmem:[%s233 + $0xb8] sm:$0xff]
        %v1297 = vld [vmem:[%s233 + $0xc0] sm:$0xff]
        %v1298 = vld [vmem:[%s233 + $0xc8] sm:$0xff]
        %v1299 = vld [vmem:[%s233 + $0xd0] sm:$0xff]
        %v1300 = vld [vmem:[%s233 + $0xd8] sm:$0xff]
        %v1301 = vld [vmem:[%s233 + $0xe0] sm:$0xff]
        %v1302 = vld [vmem:[%s233 + $0xe8] sm:$0xff]
        %v1303 = vld [vmem:[%s233 + $0xf0] sm:$0xff]
        %v1304 = vld [vmem:[%s233 + $0xf8] sm:$0xff]
        %v1305 = vadd.f32 %v1273, %v1157
        %v1306 = vadd.f32 %v1274, %v1159
        %v1307 = vadd.f32 %v1275, %v1162
        %v1308 = vadd.f32 %v1276, %v1164
        %v1309 = vadd.f32 %v1277, %v1167
        %v1310 = vadd.f32 %v1278, %v1169
        %v1311 = vadd.f32 %v1279, %v1172
        %v1312 = vadd.f32 %v1280, %v1174
        %v1313 = vadd.f32 %v1281, %v1177
        %v1314 = vadd.f32 %v1282, %v1179
        %v1315 = vadd.f32 %v1283, %v1182
        %v1316 = vadd.f32 %v1284, %v1184
        %v1317 = vadd.f32 %v1285, %v1187
        %v1318 = vadd.f32 %v1286, %v1189
        %v1319 = vadd.f32 %v1287, %v1192
        %v1320 = vadd.f32 %v1288, %v1194
        %v1321 = vadd.f32 %v1289, %v1197
        %v1322 = vadd.f32 %v1290, %v1199
        %v1323 = vadd.f32 %v1291, %v1202
        %v1324 = vadd.f32 %v1292, %v1204
        %v1325 = vadd.f32 %v1293, %v1207
        %v1326 = vadd.f32 %v1294, %v1209
        %v1327 = vadd.f32 %v1295, %v1212
        %v1328 = vadd.f32 %v1296, %v1214
        %v1329 = vadd.f32 %v1297, %v1217
        %v1330 = vadd.f32 %v1298, %v1219
        %v1331 = vadd.f32 %v1299, %v1222
        %v1332 = vadd.f32 %v1300, %v1224
        %v1333 = vadd.f32 %v1301, %v1227
        %v1334 = vadd.f32 %v1302, %v1229
        %v1335 = vadd.f32 %v1303, %v1232
        %v1336 = vadd.f32 %v1304, %v1234
        %vm1337 = vcmask 261120
        %1338 = vst.msk [vmem:[%s233] sm:$0xff] %vm1337, %v1305
        %1339 = vst.msk [vmem:[%s233 + $0x8] sm:$0xff] %vm1337, %v1306
        %1340 = vst.msk [vmem:[%s233 + $0x10] sm:$0xff] %vm1337, %v1307
        %1341 = vst.msk [vmem:[%s233 + $0x18] sm:$0xff] %vm1337, %v1308
        %1342 = vst.msk [vmem:[%s233 + $0x20] sm:$0xff] %vm1337, %v1309
        %1343 = vst.msk [vmem:[%s233 + $0x28] sm:$0xff] %vm1337, %v1310
        %1344 = vst.msk [vmem:[%s233 + $0x30] sm:$0xff] %vm1337, %v1311
        %1345 = vst.msk [vmem:[%s233 + $0x38] sm:$0xff] %vm1337, %v1312
        %1346 = vst.msk [vmem:[%s233 + $0x40] sm:$0xff] %vm1337, %v1313
        %1347 = vst.msk [vmem:[%s233 + $0x48] sm:$0xff] %vm1337, %v1314
        %1348 = vst.msk [vmem:[%s233 + $0x50] sm:$0xff] %vm1337, %v1315
        %1349 = vst.msk [vmem:[%s233 + $0x58] sm:$0xff] %vm1337, %v1316
        %1350 = vst.msk [vmem:[%s233 + $0x60] sm:$0xff] %vm1337, %v1317
        %1351 = vst.msk [vmem:[%s233 + $0x68] sm:$0xff] %vm1337, %v1318
        %1352 = vst.msk [vmem:[%s233 + $0x70] sm:$0xff] %vm1337, %v1319
        %1353 = vst.msk [vmem:[%s233 + $0x78] sm:$0xff] %vm1337, %v1320
        %1354 = vst.msk [vmem:[%s233 + $0x80] sm:$0xff] %vm1337, %v1321
        %1355 = vst.msk [vmem:[%s233 + $0x88] sm:$0xff] %vm1337, %v1322
        %1356 = vst.msk [vmem:[%s233 + $0x90] sm:$0xff] %vm1337, %v1323
        %1357 = vst.msk [vmem:[%s233 + $0x98] sm:$0xff] %vm1337, %v1324
        %1358 = vst.msk [vmem:[%s233 + $0xa0] sm:$0xff] %vm1337, %v1325
        %1359 = vst.msk [vmem:[%s233 + $0xa8] sm:$0xff] %vm1337, %v1326
        %1360 = vst.msk [vmem:[%s233 + $0xb0] sm:$0xff] %vm1337, %v1327
        %1361 = vst.msk [vmem:[%s233 + $0xb8] sm:$0xff] %vm1337, %v1328
        %1362 = vst.msk [vmem:[%s233 + $0xc0] sm:$0xff] %vm1337, %v1329
        %1363 = vst.msk [vmem:[%s233 + $0xc8] sm:$0xff] %vm1337, %v1330
        %1364 = vst.msk [vmem:[%s233 + $0xd0] sm:$0xff] %vm1337, %v1331
        %1365 = vst.msk [vmem:[%s233 + $0xd8] sm:$0xff] %vm1337, %v1332
        %1366 = vst.msk [vmem:[%s233 + $0xe0] sm:$0xff] %vm1337, %v1333
        %1367 = vst.msk [vmem:[%s233 + $0xe8] sm:$0xff] %vm1337, %v1334
        %1368 = vst.msk [vmem:[%s233 + $0xf0] sm:$0xff] %vm1337, %v1335
        %1369 = vst.msk [vmem:[%s233 + $0xf8] sm:$0xff] %vm1337, %v1336
        // Predicated region
        $region41: #{tpu_custom_call.1} parent=31 // pred_check
          %p1370 = pneg %p1236
        $region42: #{tpu_custom_call.1} parent=31 // pred_check_branch
          %1372 = sbr.rel (%p1370) target = $region44
        $region43: #{tpu_custom_call.1} parent=31 // pred_region
          %v1373 = vld [vmem:[%s233] sm:$0xff]
          %v1374 = vld [vmem:[%s233 + $0x8] sm:$0xff]
          %v1375 = vld [vmem:[%s233 + $0x10] sm:$0xff]
          %v1376 = vld [vmem:[%s233 + $0x18] sm:$0xff]
          %v1377 = vld [vmem:[%s233 + $0x20] sm:$0xff]
          %v1378 = vld [vmem:[%s233 + $0x28] sm:$0xff]
          %v1379 = vld [vmem:[%s233 + $0x30] sm:$0xff]
          %v1380 = vld [vmem:[%s233 + $0x38] sm:$0xff]
          %v1381 = vld [vmem:[%s233 + $0x40] sm:$0xff]
          %v1382 = vld [vmem:[%s233 + $0x48] sm:$0xff]
          %v1383 = vld [vmem:[%s233 + $0x50] sm:$0xff]
          %v1384 = vld [vmem:[%s233 + $0x58] sm:$0xff]
          %v1385 = vld [vmem:[%s233 + $0x60] sm:$0xff]
          %v1386 = vld [vmem:[%s233 + $0x68] sm:$0xff]
          %v1387 = vld [vmem:[%s233 + $0x70] sm:$0xff]
          %v1388 = vld [vmem:[%s233 + $0x78] sm:$0xff]
          %v1389 = vld [vmem:[%s233 + $0x80] sm:$0xff]
          %v1390 = vld [vmem:[%s233 + $0x88] sm:$0xff]
          %v1391 = vld [vmem:[%s233 + $0x90] sm:$0xff]
          %v1392 = vld [vmem:[%s233 + $0x98] sm:$0xff]
          %v1393 = vld [vmem:[%s233 + $0xa0] sm:$0xff]
          %v1394 = vld [vmem:[%s233 + $0xa8] sm:$0xff]
          %v1395 = vld [vmem:[%s233 + $0xb0] sm:$0xff]
          %v1396 = vld [vmem:[%s233 + $0xb8] sm:$0xff]
          %v1397 = vld [vmem:[%s233 + $0xc0] sm:$0xff]
          %v1398 = vld [vmem:[%s233 + $0xc8] sm:$0xff]
          %v1399 = vld [vmem:[%s233 + $0xd0] sm:$0xff]
          %v1400 = vld [vmem:[%s233 + $0xd8] sm:$0xff]
          %v1401 = vld [vmem:[%s233 + $0xe0] sm:$0xff]
          %v1402 = vld [vmem:[%s233 + $0xe8] sm:$0xff]
          %v1403 = vld [vmem:[%s233 + $0xf0] sm:$0xff]
          %v1404 = vld [vmem:[%s233 + $0xf8] sm:$0xff]
          %v1405 = vld [vmem:[%s227] sm:$0xff]
          %v1406 = vld [vmem:[%s227 + $0x8] sm:$0xff]
          %v1407 = vld [vmem:[%s227 + $0x10] sm:$0xff]
          %v1408 = vld [vmem:[%s227 + $0x18] sm:$0xff]
          %v1409 = vld [vmem:[%s227 + $0x20] sm:$0xff]
          %v1410 = vld [vmem:[%s227 + $0x28] sm:$0xff]
          %v1411 = vld [vmem:[%s227 + $0x30] sm:$0xff]
          %v1412 = vld [vmem:[%s227 + $0x38] sm:$0xff]
          %v1413 = vld [vmem:[%s227 + $0x40] sm:$0xff]
          %v1414 = vld [vmem:[%s227 + $0x48] sm:$0xff]
          %v1415 = vld [vmem:[%s227 + $0x50] sm:$0xff]
          %v1416 = vld [vmem:[%s227 + $0x58] sm:$0xff]
          %v1417 = vld [vmem:[%s227 + $0x60] sm:$0xff]
          %v1418 = vld [vmem:[%s227 + $0x68] sm:$0xff]
          %v1419 = vld [vmem:[%s227 + $0x70] sm:$0xff]
          %v1420 = vld [vmem:[%s227 + $0x78] sm:$0xff]
          %v1421 = vld [vmem:[%s227 + $0x80] sm:$0xff]
          %v1422 = vld [vmem:[%s227 + $0x88] sm:$0xff]
          %v1423 = vld [vmem:[%s227 + $0x90] sm:$0xff]
          %v1424 = vld [vmem:[%s227 + $0x98] sm:$0xff]
          %v1425 = vld [vmem:[%s227 + $0xa0] sm:$0xff]
          %v1426 = vld [vmem:[%s227 + $0xa8] sm:$0xff]
          %v1427 = vld [vmem:[%s227 + $0xb0] sm:$0xff]
          %v1428 = vld [vmem:[%s227 + $0xb8] sm:$0xff]
          %v1429 = vld [vmem:[%s227 + $0xc0] sm:$0xff]
          %v1430 = vld [vmem:[%s227 + $0xc8] sm:$0xff]
          %v1431 = vld [vmem:[%s227 + $0xd0] sm:$0xff]
          %v1432 = vld [vmem:[%s227 + $0xd8] sm:$0xff]
          %v1433 = vld [vmem:[%s227 + $0xe0] sm:$0xff]
          %v1434 = vld [vmem:[%s227 + $0xe8] sm:$0xff]
          %v1435 = vld [vmem:[%s227 + $0xf0] sm:$0xff]
          %v1436 = vld [vmem:[%s227 + $0xf8] sm:$0xff]
          %v1437 = vadd.f32 %v1373, %v1405
          %v1438 = vadd.f32 %v1374, %v1406
          %v1439 = vadd.f32 %v1375, %v1407
          %v1440 = vadd.f32 %v1376, %v1408
          %v1441 = vadd.f32 %v1377, %v1409
          %v1442 = vadd.f32 %v1378, %v1410
          %v1443 = vadd.f32 %v1379, %v1411
          %v1444 = vadd.f32 %v1380, %v1412
          %v1445 = vadd.f32 %v1381, %v1413
          %v1446 = vadd.f32 %v1382, %v1414
          %v1447 = vadd.f32 %v1383, %v1415
          %v1448 = vadd.f32 %v1384, %v1416
          %v1449 = vadd.f32 %v1385, %v1417
          %v1450 = vadd.f32 %v1386, %v1418
          %v1451 = vadd.f32 %v1387, %v1419
          %v1452 = vadd.f32 %v1388, %v1420
          %v1453 = vadd.f32 %v1389, %v1421
          %v1454 = vadd.f32 %v1390, %v1422
          %v1455 = vadd.f32 %v1391, %v1423
          %v1456 = vadd.f32 %v1392, %v1424
          %v1457 = vadd.f32 %v1393, %v1425
          %v1458 = vadd.f32 %v1394, %v1426
          %v1459 = vadd.f32 %v1395, %v1427
          %v1460 = vadd.f32 %v1396, %v1428
          %v1461 = vadd.f32 %v1397, %v1429
          %v1462 = vadd.f32 %v1398, %v1430
          %v1463 = vadd.f32 %v1399, %v1431
          %v1464 = vadd.f32 %v1400, %v1432
          %v1465 = vadd.f32 %v1401, %v1433
          %v1466 = vadd.f32 %v1402, %v1434
          %v1467 = vadd.f32 %v1403, %v1435
          %v1468 = vadd.f32 %v1404, %v1436
          %1469 = vst.msk [vmem:[%s233] sm:$0xff] %vm1337, %v1437
          %1470 = vst.msk [vmem:[%s233 + $0x8] sm:$0xff] %vm1337, %v1438
          %1471 = vst.msk [vmem:[%s233 + $0x10] sm:$0xff] %vm1337, %v1439
          %1472 = vst.msk [vmem:[%s233 + $0x18] sm:$0xff] %vm1337, %v1440
          %1473 = vst.msk [vmem:[%s233 + $0x20] sm:$0xff] %vm1337, %v1441
          %1474 = vst.msk [vmem:[%s233 + $0x28] sm:$0xff] %vm1337, %v1442
          %1475 = vst.msk [vmem:[%s233 + $0x30] sm:$0xff] %vm1337, %v1443
          %1476 = vst.msk [vmem:[%s233 + $0x38] sm:$0xff] %vm1337, %v1444
          %1477 = vst.msk [vmem:[%s233 + $0x40] sm:$0xff] %vm1337, %v1445
          %1478 = vst.msk [vmem:[%s233 + $0x48] sm:$0xff] %vm1337, %v1446
          %1479 = vst.msk [vmem:[%s233 + $0x50] sm:$0xff] %vm1337, %v1447
          %1480 = vst.msk [vmem:[%s233 + $0x58] sm:$0xff] %vm1337, %v1448
          %1481 = vst.msk [vmem:[%s233 + $0x60] sm:$0xff] %vm1337, %v1449
          %1482 = vst.msk [vmem:[%s233 + $0x68] sm:$0xff] %vm1337, %v1450
          %1483 = vst.msk [vmem:[%s233 + $0x70] sm:$0xff] %vm1337, %v1451
          %1484 = vst.msk [vmem:[%s233 + $0x78] sm:$0xff] %vm1337, %v1452
          %1485 = vst.msk [vmem:[%s233 + $0x80] sm:$0xff] %vm1337, %v1453
          %1486 = vst.msk [vmem:[%s233 + $0x88] sm:$0xff] %vm1337, %v1454
          %1487 = vst.msk [vmem:[%s233 + $0x90] sm:$0xff] %vm1337, %v1455
          %1488 = vst.msk [vmem:[%s233 + $0x98] sm:$0xff] %vm1337, %v1456
          %1489 = vst.msk [vmem:[%s233 + $0xa0] sm:$0xff] %vm1337, %v1457
          %1490 = vst.msk [vmem:[%s233 + $0xa8] sm:$0xff] %vm1337, %v1458
          %1491 = vst.msk [vmem:[%s233 + $0xb0] sm:$0xff] %vm1337, %v1459
          %1492 = vst.msk [vmem:[%s233 + $0xb8] sm:$0xff] %vm1337, %v1460
          %1493 = vst.msk [vmem:[%s233 + $0xc0] sm:$0xff] %vm1337, %v1461
          %1494 = vst.msk [vmem:[%s233 + $0xc8] sm:$0xff] %vm1337, %v1462
          %1495 = vst.msk [vmem:[%s233 + $0xd0] sm:$0xff] %vm1337, %v1463
          %1496 = vst.msk [vmem:[%s233 + $0xd8] sm:$0xff] %vm1337, %v1464
          %1497 = vst.msk [vmem:[%s233 + $0xe0] sm:$0xff] %vm1337, %v1465
          %1498 = vst.msk [vmem:[%s233 + $0xe8] sm:$0xff] %vm1337, %v1466
          %1499 = vst.msk [vmem:[%s233 + $0xf0] sm:$0xff] %vm1337, %v1467
          %1500 = vst.msk [vmem:[%s233 + $0xf8] sm:$0xff] %vm1337, %v1468
        $region44: #{tpu_custom_call.1} parent=31 // pred_fallthru
          _
        %s1501 = smul.u32 32, %s21
        %p1502 = scmp.lt.s32.totalorder %s1501, 63
        %s1503 = scalar_select %p1502, %s1501, 63
        %s1504 = smul.addr %s1503, 8
        %s1505 = scalar_lea.vmem %s3, %s1504
        // Predicated region
        $region45: #{tpu_custom_call.1} parent=31 // pred_check
          %p1506 = pneg %p122
        $region46: #{tpu_custom_call.1} parent=31 // pred_check_branch
          %1508 = sbr.rel (%p1506) target = $region48
        $region47: #{tpu_custom_call.1} parent=31 // pred_region
          %s1509 = smul.u32 32, %s21
        $region48: #{tpu_custom_call.1} parent=31 // pred_fallthru
          _
      $region32: #{tpu_custom_call.1} parent=5 // pred_fallthru
        _
      %p1510 = scmp.le.s32.totalorder 2, %s12
      // Predicated region
      $region49: #{tpu_custom_call.1} parent=5 // pred_check
        %p1511 = pneg %p1510
      $region50: #{tpu_custom_call.1} parent=5 // pred_check_branch
        %1513 = sbr.rel (%p1511) target = $region52
      $region51: #{tpu_custom_call.1} parent=5 // pred_region
        %s1514 = ssub.s32 %s12, 2
        // Predicated region
        $region53: #{tpu_custom_call.1} parent=51 // pred_check
          %p1515 = pneg %p128
        $region54: #{tpu_custom_call.1} parent=51 // pred_check_branch
          %1517 = sbr.rel (%p1515) target = $region56
        $region55: #{tpu_custom_call.1} parent=51 // pred_region
          %s1518 = smul.u32 32, %s23
          %p1519 = scmp.lt.s32.totalorder %s1518, 63
          %s1520 = scalar_select %p1519, %s1518, 63
          %s1521 = smul.addr %s1520, 8
          %s1522 = scalar_lea.vmem %s3, %s1521
        $region56: #{tpu_custom_call.1} parent=51 // pred_fallthru
          _
      $region52: #{tpu_custom_call.1} parent=5 // pred_fallthru
        _
    $region6: #{tpu_custom_call.1} parent=1 // loop_footer
      %s16 = sadd.s32 1, %s12
    $region7: #{tpu_custom_call.1} parent=1 // loop_footer_branch
      %11 = sbr.rel target = $region3
    $region8: #{tpu_custom_call.1} parent=1 // loop_exit
      _
    %1523 = vsyncpa [#allocation3], 1
    %s1524 = scalar_lea.sflag [#allocation3], 1
    %1525 = vsyncpa %s1524, 1

</llo_original>
